<compile_context>
chip_gen: v5e
topology: v5e:2x2
jax: 0.10.0
libtpu: 0.0.40
codegen_flags: <defaults>
</compile_context>

<pallas_src>
import functools

import jax
import jax.numpy as jnp
from jax.experimental import pallas as pl
from jax.experimental.pallas import tpu as pltpu


def _round_up(n, m):
    return ((n + m - 1) // m) * m


# ----------------------------------------------------------------------------
# Kernel: whole forward (message + action branch) for one batch tile.
# ----------------------------------------------------------------------------
def _make_kernel(n_tanh, h1p, lane_c, act_dtype):
    c2_off = h1p             # fc2 message contribution segment
    c1_off = h1p + lane_c    # fc1 segment

    def kernel(ma_ref, xin_ref,
               wbig_ref, ab1_ref, a2_ref, ab2_ref, a3_ref, ab3_ref,
               b1_ref, w2x_ref, b2_ref, w3_ref, b3_ref,
               out_ref):
        f32 = jnp.float32
        bf16 = jnp.bfloat16
        max_action = ma_ref[0, 0]

        # LHS = [tanh(x) | tanh(m) | x] built with a lane-iota select (no concat).
        v = xin_ref[...].astype(act_dtype)                         # (TB, K)
        col = jax.lax.broadcasted_iota(jnp.int32, v.shape, 1)
        lhs = jnp.where(col < n_tanh, jnp.tanh(v), v).astype(bf16)

        # One MXU pass for all three first-layer matmuls.
        hbig = jnp.dot(lhs, wbig_ref[...], preferred_element_type=f32)  # (TB, 768)

        # --- action branch: max_action * tanh(MLPBase(tanh([x|m]))) ----------
        h = jnp.maximum(hbig[:, :h1p] + ab1_ref[...], 0.0)              # (TB, 512)
        h = jnp.maximum(
            jnp.dot(h.astype(bf16), a2_ref[...], preferred_element_type=f32)
            + ab2_ref[...], 0.0)                                         # (TB, 384)
        a = (jnp.dot(h.astype(bf16), a3_ref[...], preferred_element_type=f32)
             + ab3_ref[...])                                             # (TB, 128)
        act = max_action * jnp.tanh(a)       # nonzero only in the action lanes

        # --- message branch ----------------------------------------------------
        h1 = hbig[:, c1_off:c1_off + lane_c] + b1_ref[...]               # fc1 out
        inv1 = jax.lax.rsqrt(
            jnp.maximum(jnp.sum(h1 * h1, axis=-1, keepdims=True), 1e-24))
        th1 = jnp.tanh((h1 * inv1).astype(act_dtype)).astype(bf16)
        h2 = (jnp.dot(th1, w2x_ref[...], preferred_element_type=f32)
              + hbig[:, c2_off:c2_off + lane_c] + b2_ref[...])
        th2 = jnp.tanh(h2.astype(act_dtype)).astype(bf16)
        h3 = jnp.dot(th2, w3_ref[...], preferred_element_type=f32) + b3_ref[...]
        inv3 = jax.lax.rsqrt(
            jnp.maximum(jnp.sum(h3 * h3, axis=-1, keepdims=True), 1e-24))
        msg = h3 * inv3                       # nonzero only in the msg lanes

        # Single lane-dense 128-wide store; lanes are disjoint so add is exact.
        out_ref[...] = (msg + act).astype(out_ref.dtype)

    return kernel


# ----------------------------------------------------------------------------
# One-time parameter packing: bf16 cast, lane padding, block-matrix fusion.
# ----------------------------------------------------------------------------
def prepare_params(params, state_dim):
    f32, bf16 = jnp.float32, jnp.bfloat16
    w1, b1 = params["w1"], params["b1"]       # fc1  (S, 64)
    w2, b2 = params["w2"], params["b2"]       # fc2  (64 + Mm, 64)
    w3, b3 = params["w3"], params["b3"]       # fc3  (64, msg_dim)
    a1, ab1 = params["a1"], params["ab1"]     # MLP l1 (S + Mm, 400)
    a2, ab2 = params["a2"], params["ab2"]     # MLP l2 (400, 300)
    a3, ab3 = params["a3"], params["ab3"]     # MLP l3 (300, A)

    S = state_dim
    in_cat = a1.shape[0]
    Mm = in_cat - S
    msg_dim = w3.shape[1]
    action_dim = a3.shape[1]

    H1, H2 = a1.shape[1], a2.shape[1]
    H1P, H2P = _round_up(H1, 128), _round_up(H2, 128)      # 512, 384
    C = 128                                                  # fc1/fc2/fc3 lane pad
    assert H1P % 128 == 0 and H2P % 128 == 0
    assert msg_dim + action_dim <= C, "combined output must fit in 128 lanes"
    assert w1.shape[1] <= C and w2.shape[1] <= C and w3.shape[0] <= C

    K = S + Mm + S               # [tanh(x) | tanh(m) | x]
    N1 = H1P + C + C             # 768

    def pad2(arr, rows, cols):
        return jnp.pad(arr, ((0, rows - arr.shape[0]), (0, cols - arr.shape[1])))

    # Fused first-layer block weight.
    a1_p = jnp.pad(a1, ((0, 0), (0, H1P - H1)))
    wbig = jnp.zeros((K, N1), f32)
    wbig = wbig.at[:S + Mm, :H1P].set(a1_p)                              # -> MLP l1
    wbig = wbig.at[S:S + Mm, H1P:H1P + w2.shape[1]].set(w2[64:])         # -> fc2 (m rows)
    wbig = wbig.at[S + Mm:, H1P + C:H1P + C + w1.shape[1]].set(w1)       # -> fc1 (x rows)

    # Final layers placed directly at their output lane offsets.
    a3_place = jnp.zeros((H2P, C), f32).at[:H2, msg_dim:msg_dim + action_dim].set(a3)
    ab3_place = jnp.zeros((1, C), f32).at[:, msg_dim:msg_dim + action_dim].set(ab3)
    w3_place = jnp.zeros((C, C), f32).at[:w3.shape[0], :msg_dim].set(w3)
    b3_place = jnp.zeros((1, C), f32).at[:, :msg_dim].set(b3)

    return {
        "wbig": wbig.astype(bf16),
        "ab1":  pad2(ab1, 1, H1P).astype(f32),
        "a2":   pad2(a2, H1P, H2P).astype(bf16),
        "ab2":  pad2(ab2, 1, H2P).astype(f32),
        "a3":   a3_place.astype(bf16),
        "ab3":  ab3_place.astype(f32),
        "b1":   pad2(b1, 1, C).astype(f32),
        "w2x":  pad2(w2[:64], C, C).astype(bf16),
        "b2":   pad2(b2, 1, C).astype(f32),
        "w3":   w3_place.astype(bf16),
        "b3":   b3_place.astype(f32),
        "meta": dict(state_dim=S, msg_dim=msg_dim, action_dim=action_dim,
                     h1p=H1P, h2p=H2P, c=C, n_tanh=S + Mm, k=K),
    }


# ----------------------------------------------------------------------------
# Chip-aware defaults (tile size / activation dtype / dual-TensorCore split).
# ----------------------------------------------------------------------------
@functools.lru_cache(maxsize=1)
def _chip_config():
    try:
        kind = jax.devices()[0].device_kind.lower()
    except Exception:
        kind = ""
    is_v5e = ("v5e" in kind) or ("v5 lite" in kind) or ("v5litepod" in kind)
    newgen = ("v6" in kind) or ("v7" in kind)
    two_cores = "v7" in kind
    tb = 128 if is_v5e else 256
    act_dtype = jnp.bfloat16 if newgen else jnp.float32
    return tb, two_cores, act_dtype


# ----------------------------------------------------------------------------
# Per-call wrapper: concat inputs, one pallas_call, slice the two outputs.
# ----------------------------------------------------------------------------
def actor_up_action(x, msgs, kp, max_action, *, tb=None):
    meta = kp["meta"]
    S, msg_dim, action_dim = meta["state_dim"], meta["msg_dim"], meta["action_dim"]
    h1p, h2p, C = meta["h1p"], meta["h2p"], meta["c"]
    n_tanh, K = meta["n_tanh"], meta["k"]

    tb_default, two_cores, act_dtype = _chip_config()
    if tb is None:
        tb = tb_default

    m = jnp.concatenate(msgs, axis=-1) if len(msgs) > 1 else msgs[0]
    xin = jnp.concatenate([x, m, x], axis=-1)          # (B, 2S + Mm)
    B = x.shape[0]
    assert xin.shape[-1] == K

    # Batch tile: full batch if it fits, else tb; on v7x split so grid >= 2.
    TB = B if B <= tb else tb
    if two_cores and B > 16:
        TB = min(TB, _round_up(pl.cdiv(B, 2), 8))
    grid = (pl.cdiv(B, TB),)

    ma = jnp.full((1, 1), max_action, jnp.float32)

    weights = (kp["wbig"], kp["ab1"], kp["a2"], kp["ab2"], kp["a3"], kp["ab3"],
               kp["b1"], kp["w2x"], kp["b2"], kp["w3"], kp["b3"])

    in_specs = ([pl.BlockSpec(memory_space=pltpu.MemorySpace.SMEM),
                 pl.BlockSpec((TB, K), lambda i: (i, 0))]
                + [pl.BlockSpec(w.shape, lambda i: (0, 0)) for w in weights])
    out_specs = pl.BlockSpec((TB, C), lambda i: (i, 0))
    out_shape = jax.ShapeDtypeStruct((B, C), jnp.float32)

    weight_bytes = sum(int(w.size) * w.dtype.itemsize for w in weights)
    cost = pl.CostEstimate(
        flops=int(2 * B * (K * (h1p + 2 * C) + h1p * h2p + h2p * C + 2 * C * C)),
        transcendentals=int(B * (K + 3 * C)),
        bytes_accessed=int(4 * B * (K + C) + weight_bytes))

    out = pl.pallas_call(
        _make_kernel(n_tanh, h1p, C, act_dtype),
        grid=grid,
        in_specs=in_specs,
        out_specs=out_specs,
        out_shape=out_shape,
        cost_estimate=cost,
        compiler_params=pltpu.CompilerParams(
            dimension_semantics=("parallel",)),
    )(ma, xin, *weights)

    msg_up = out[:, :msg_dim]
    action = out[:, msg_dim:msg_dim + action_dim]
    return msg_up, action


# ----------------------------------------------------------------------------
# Deterministic parameter init (PyTorch nn.Linear default: U(-1/sqrt(fan_in), .))
# ----------------------------------------------------------------------------
def _linear_init(key, fan_in, fan_out):
    kw, kb = jax.random.split(key)
    bound = 1.0 / float(fan_in) ** 0.5
    w = jax.random.uniform(kw, (fan_in, fan_out), jnp.float32, -bound, bound)
    b = jax.random.uniform(kb, (1, fan_out), jnp.float32, -bound, bound)
    return w, b


def init_params(key, state_dim, msg_dim, max_children, action_dim):
    in_cat = state_dim + msg_dim * max_children
    keys = jax.random.split(key, 6)
    p = {}
    p["w1"], p["b1"] = _linear_init(keys[0], state_dim, 64)                     # fc1
    p["w2"], p["b2"] = _linear_init(keys[1], 64 + msg_dim * max_children, 64)   # fc2
    p["w3"], p["b3"] = _linear_init(keys[2], 64, msg_dim)                       # fc3
    p["a1"], p["ab1"] = _linear_init(keys[3], in_cat, 400)                      # MLPBase.l1
    p["a2"], p["ab2"] = _linear_init(keys[4], 400, 300)                         # MLPBase.l2
    p["a3"], p["ab3"] = _linear_init(keys[5], 300, action_dim)                  # MLPBase.l3
    return p


# Pure-JAX f32 reference (sanity check, mirrors the PyTorch forward).
def _reference(x, msgs, params, max_action):
    m = jnp.concatenate(msgs, axis=-1)
    xm = jnp.tanh(jnp.concatenate([x, m], axis=-1))
    h = jax.nn.relu(xm @ params["a1"] + params["ab1"])
    h = jax.nn.relu(h @ params["a2"] + params["ab2"])
    action = max_action * jnp.tanh(h @ params["a3"] + params["ab3"])
    x1 = x @ params["w1"] + params["b1"]
    x1 = x1 / jnp.maximum(jnp.linalg.norm(x1, axis=-1, keepdims=True), 1e-12)
    xm2 = jnp.tanh(jnp.concatenate([x1, m], axis=-1))
    h2 = jnp.tanh(xm2 @ params["w2"] + params["b2"])
    h3 = h2 @ params["w3"] + params["b3"]
    msg = h3 / jnp.maximum(jnp.linalg.norm(h3, axis=-1, keepdims=True), 1e-12)
    return msg, action


if __name__ == "__main__":
    B, state_dim, msg_dim, max_children, action_dim = 8, 32, 16, 2, 8
    max_action = 1.0

    key = jax.random.PRNGKey(0)
    kpar, kx, km1, km2 = jax.random.split(key, 4)
    params = init_params(kpar, state_dim, msg_dim, max_children, action_dim)
    kparams = prepare_params(params, state_dim)   # one-time packing (bf16/pad/fuse)

    x = jax.random.normal(kx, (B, state_dim), jnp.float32)
    m1 = jax.random.normal(km1, (B, msg_dim), jnp.float32)
    m2 = jax.random.normal(km2, (B, msg_dim), jnp.float32)

    msg_up, action = actor_up_action(x, (m1, m2), kparams, max_action)
    jax.block_until_ready((msg_up, action))

    msg_ref, act_ref = _reference(x, (m1, m2), params, max_action)
    assert msg_up.shape == (B, msg_dim) and action.shape == (B, action_dim)
    # bf16 MXU weights (and bf16 tanh on v6e/v7x) vs f32 reference -> loose tol.
    assert jnp.allclose(msg_up, msg_ref, atol=3e-2, rtol=3e-2), \
        float(jnp.max(jnp.abs(msg_up - msg_ref)))
    assert jnp.allclose(action, act_ref, atol=3e-2, rtol=3e-2), \
        float(jnp.max(jnp.abs(action - act_ref)))

    print("KERNEL_OK")
</pallas_src>

<mosaic_0001>
module attributes {stable_mosaic.version = 11 : i64} {
  func.func @kernel(%arg0: i32, %arg1: memref<1x1xf32, #tpu.memory_space<smem>>, %arg2: memref<8x96xf32, #tpu.memory_space<vmem>>, %arg3: memref<96x768xbf16, #tpu.memory_space<vmem>>, %arg4: memref<1x512xf32, #tpu.memory_space<vmem>>, %arg5: memref<512x384xbf16, #tpu.memory_space<vmem>>, %arg6: memref<1x384xf32, #tpu.memory_space<vmem>>, %arg7: memref<384x128xbf16, #tpu.memory_space<vmem>>, %arg8: memref<1x128xf32, #tpu.memory_space<vmem>>, %arg9: memref<1x128xf32, #tpu.memory_space<vmem>>, %arg10: memref<128x128xbf16, #tpu.memory_space<vmem>>, %arg11: memref<1x128xf32, #tpu.memory_space<vmem>>, %arg12: memref<128x128xbf16, #tpu.memory_space<vmem>>, %arg13: memref<1x128xf32, #tpu.memory_space<vmem>>, %arg14: memref<8x128xf32, #tpu.memory_space<vmem>>) attributes {dimension_semantics = [#tpu.dimension_semantics<parallel>], iteration_bounds = array<i64: 1>, scalar_prefetch = 0 : i64, scratch_operands = 0 : i64, tpu.core_type = #tpu.core_type<tc>, window_params = [{transform_indices = @transform_0, window_bounds = array<i64: 1, 1>}, {transform_indices = @transform_1, window_bounds = array<i64: 8, 96>}, {pipeline_mode = #tpu.pipeline_mode<synchronous>, transform_indices = @transform_2, window_bounds = array<i64: 96, 768>}, {pipeline_mode = #tpu.pipeline_mode<synchronous>, transform_indices = @transform_3, window_bounds = array<i64: 1, 512>}, {pipeline_mode = #tpu.pipeline_mode<synchronous>, transform_indices = @transform_4, window_bounds = array<i64: 512, 384>}, {pipeline_mode = #tpu.pipeline_mode<synchronous>, transform_indices = @transform_5, window_bounds = array<i64: 1, 384>}, {pipeline_mode = #tpu.pipeline_mode<synchronous>, transform_indices = @transform_6, window_bounds = array<i64: 384, 128>}, {pipeline_mode = #tpu.pipeline_mode<synchronous>, transform_indices = @transform_7, window_bounds = array<i64: 1, 128>}, {pipeline_mode = #tpu.pipeline_mode<synchronous>, transform_indices = @transform_8, window_bounds = array<i64: 1, 128>}, {pipeline_mode = #tpu.pipeline_mode<synchronous>, transform_indices = @transform_9, window_bounds = array<i64: 128, 128>}, {pipeline_mode = #tpu.pipeline_mode<synchronous>, transform_indices = @transform_10, window_bounds = array<i64: 1, 128>}, {pipeline_mode = #tpu.pipeline_mode<synchronous>, transform_indices = @transform_11, window_bounds = array<i64: 128, 128>}, {pipeline_mode = #tpu.pipeline_mode<synchronous>, transform_indices = @transform_12, window_bounds = array<i64: 1, 128>}, {transform_indices = @transform_13, window_bounds = array<i64: 8, 128>}]} {
    %c0 = arith.constant 0 : index
    %c0_0 = arith.constant 0 : index
    %0 = memref.load %arg1[%c0, %c0_0] : memref<1x1xf32, #tpu.memory_space<smem>>
    %c0_1 = arith.constant 0 : index
    %c0_2 = arith.constant 0 : index
    %1 = vector.load %arg2[%c0_1, %c0_2] : memref<8x96xf32, #tpu.memory_space<vmem>>, vector<8x96xf32>
    %2 = tpu.iota {dimensions = array<i32: 1>} : vector<8x96xi32>
    %c64_i32 = arith.constant 64 : i32
    %3 = vector.broadcast %c64_i32 : i32 to vector<8x96xi32>
    %4 = arith.cmpi slt, %2, %3 : vector<8x96xi32>
    %5 = math.tanh %1 : vector<8x96xf32>
    %6 = arith.select %4, %5, %1 : vector<8x96xi1>, vector<8x96xf32>
    %7 = arith.truncf %6 : vector<8x96xf32> to vector<8x96xbf16>
    %c0_3 = arith.constant 0 : index
    %c0_4 = arith.constant 0 : index
    %8 = vector.load %arg3[%c0_3, %c0_4] : memref<96x768xbf16, #tpu.memory_space<vmem>>, vector<96x768xbf16>
    %cst = arith.constant dense<0.000000e+00> : vector<8x768xf32>
    %9 = tpu.matmul %7, %8, %cst {dimension_numbers = #tpu.dot_dimension_numbers<[1], [0], [0], [1], [0, 0, 1, 1], [], []>} : vector<8x96xbf16>, vector<96x768xbf16>, vector<8x768xf32> -> vector<8x768xf32>
    %10 = vector.extract_strided_slice %9 {offsets = [0, 0], sizes = [8, 512], strides = [1, 1]} : vector<8x768xf32> to vector<8x512xf32>
    %c0_5 = arith.constant 0 : index
    %c0_6 = arith.constant 0 : index
    %11 = vector.load %arg4[%c0_5, %c0_6] : memref<1x512xf32, #tpu.memory_space<vmem>>, vector<1x512xf32>
    %12 = vector.broadcast %11 : vector<1x512xf32> to vector<8x512xf32>
    %13 = arith.addf %10, %12 : vector<8x512xf32>
    %cst_7 = arith.constant 0.000000e+00 : f32
    %14 = vector.broadcast %cst_7 : f32 to vector<8x512xf32>
    %15 = arith.maximumf %13, %14 : vector<8x512xf32>
    %16 = arith.truncf %15 : vector<8x512xf32> to vector<8x512xbf16>
    %c0_8 = arith.constant 0 : index
    %c0_9 = arith.constant 0 : index
    %17 = vector.load %arg5[%c0_8, %c0_9] : memref<512x384xbf16, #tpu.memory_space<vmem>>, vector<512x384xbf16>
    %cst_10 = arith.constant dense<0.000000e+00> : vector<8x384xf32>
    %18 = tpu.matmul %16, %17, %cst_10 {dimension_numbers = #tpu.dot_dimension_numbers<[1], [0], [0], [1], [0, 0, 1, 1], [], []>} : vector<8x512xbf16>, vector<512x384xbf16>, vector<8x384xf32> -> vector<8x384xf32>
    %c0_11 = arith.constant 0 : index
    %c0_12 = arith.constant 0 : index
    %19 = vector.load %arg6[%c0_11, %c0_12] : memref<1x384xf32, #tpu.memory_space<vmem>>, vector<1x384xf32>
    %20 = vector.broadcast %19 : vector<1x384xf32> to vector<8x384xf32>
    %21 = arith.addf %18, %20 : vector<8x384xf32>
    %cst_13 = arith.constant 0.000000e+00 : f32
    %22 = vector.broadcast %cst_13 : f32 to vector<8x384xf32>
    %23 = arith.maximumf %21, %22 : vector<8x384xf32>
    %24 = arith.truncf %23 : vector<8x384xf32> to vector<8x384xbf16>
    %c0_14 = arith.constant 0 : index
    %c0_15 = arith.constant 0 : index
    %25 = vector.load %arg7[%c0_14, %c0_15] : memref<384x128xbf16, #tpu.memory_space<vmem>>, vector<384x128xbf16>
    %cst_16 = arith.constant dense<0.000000e+00> : vector<8x128xf32>
    %26 = tpu.matmul %24, %25, %cst_16 {dimension_numbers = #tpu.dot_dimension_numbers<[1], [0], [0], [1], [0, 0, 1, 1], [], []>} : vector<8x384xbf16>, vector<384x128xbf16>, vector<8x128xf32> -> vector<8x128xf32>
    %c0_17 = arith.constant 0 : index
    %c0_18 = arith.constant 0 : index
    %27 = vector.load %arg8[%c0_17, %c0_18] : memref<1x128xf32, #tpu.memory_space<vmem>>, vector<1x128xf32>
    %28 = vector.broadcast %27 : vector<1x128xf32> to vector<8x128xf32>
    %29 = arith.addf %26, %28 : vector<8x128xf32>
    %30 = math.tanh %29 : vector<8x128xf32>
    %31 = vector.broadcast %0 : f32 to vector<8x128xf32>
    %32 = arith.mulf %31, %30 : vector<8x128xf32>
    %33 = vector.extract_strided_slice %9 {offsets = [0, 640], sizes = [8, 128], strides = [1, 1]} : vector<8x768xf32> to vector<8x128xf32>
    %c0_19 = arith.constant 0 : index
    %c0_20 = arith.constant 0 : index
    %34 = vector.load %arg9[%c0_19, %c0_20] : memref<1x128xf32, #tpu.memory_space<vmem>>, vector<1x128xf32>
    %35 = vector.broadcast %34 : vector<1x128xf32> to vector<8x128xf32>
    %36 = arith.addf %33, %35 : vector<8x128xf32>
    %37 = arith.mulf %36, %36 : vector<8x128xf32>
    %cst_21 = arith.constant dense<0.000000e+00> : vector<8xf32>
    %38 = vector.multi_reduction <add>, %37, %cst_21 [1] : vector<8x128xf32> to vector<8xf32>
    %39 = vector.shape_cast %38 : vector<8xf32> to vector<8x1xf32>
    %cst_22 = arith.constant 1.000000e-24 : f32
    %40 = vector.broadcast %cst_22 : f32 to vector<8x1xf32>
    %41 = arith.maximumf %39, %40 : vector<8x1xf32>
    %42 = math.rsqrt %41 : vector<8x1xf32>
    %43 = vector.broadcast %42 : vector<8x1xf32> to vector<8x128xf32>
    %44 = arith.mulf %36, %43 : vector<8x128xf32>
    %45 = math.tanh %44 : vector<8x128xf32>
    %46 = arith.truncf %45 : vector<8x128xf32> to vector<8x128xbf16>
    %c0_23 = arith.constant 0 : index
    %c0_24 = arith.constant 0 : index
    %47 = vector.load %arg10[%c0_23, %c0_24] : memref<128x128xbf16, #tpu.memory_space<vmem>>, vector<128x128xbf16>
    %cst_25 = arith.constant dense<0.000000e+00> : vector<8x128xf32>
    %48 = tpu.matmul %46, %47, %cst_25 {dimension_numbers = #tpu.dot_dimension_numbers<[1], [0], [0], [1], [0, 0, 1, 1], [], []>} : vector<8x128xbf16>, vector<128x128xbf16>, vector<8x128xf32> -> vector<8x128xf32>
    %49 = vector.extract_strided_slice %9 {offsets = [0, 512], sizes = [8, 128], strides = [1, 1]} : vector<8x768xf32> to vector<8x128xf32>
    %50 = arith.addf %48, %49 : vector<8x128xf32>
    %c0_26 = arith.constant 0 : index
    %c0_27 = arith.constant 0 : index
    %51 = vector.load %arg11[%c0_26, %c0_27] : memref<1x128xf32, #tpu.memory_space<vmem>>, vector<1x128xf32>
    %52 = vector.broadcast %51 : vector<1x128xf32> to vector<8x128xf32>
    %53 = arith.addf %50, %52 : vector<8x128xf32>
    %54 = math.tanh %53 : vector<8x128xf32>
    %55 = arith.truncf %54 : vector<8x128xf32> to vector<8x128xbf16>
    %c0_28 = arith.constant 0 : index
    %c0_29 = arith.constant 0 : index
    %56 = vector.load %arg12[%c0_28, %c0_29] : memref<128x128xbf16, #tpu.memory_space<vmem>>, vector<128x128xbf16>
    %cst_30 = arith.constant dense<0.000000e+00> : vector<8x128xf32>
    %57 = tpu.matmul %55, %56, %cst_30 {dimension_numbers = #tpu.dot_dimension_numbers<[1], [0], [0], [1], [0, 0, 1, 1], [], []>} : vector<8x128xbf16>, vector<128x128xbf16>, vector<8x128xf32> -> vector<8x128xf32>
    %c0_31 = arith.constant 0 : index
    %c0_32 = arith.constant 0 : index
    %58 = vector.load %arg13[%c0_31, %c0_32] : memref<1x128xf32, #tpu.memory_space<vmem>>, vector<1x128xf32>
    %59 = vector.broadcast %58 : vector<1x128xf32> to vector<8x128xf32>
    %60 = arith.addf %57, %59 : vector<8x128xf32>
    %61 = arith.mulf %60, %60 : vector<8x128xf32>
    %cst_33 = arith.constant dense<0.000000e+00> : vector<8xf32>
    %62 = vector.multi_reduction <add>, %61, %cst_33 [1] : vector<8x128xf32> to vector<8xf32>
    %63 = vector.shape_cast %62 : vector<8xf32> to vector<8x1xf32>
    %cst_34 = arith.constant 1.000000e-24 : f32
    %64 = vector.broadcast %cst_34 : f32 to vector<8x1xf32>
    %65 = arith.maximumf %63, %64 : vector<8x1xf32>
    %66 = math.rsqrt %65 : vector<8x1xf32>
    %67 = vector.broadcast %66 : vector<8x1xf32> to vector<8x128xf32>
    %68 = arith.mulf %60, %67 : vector<8x128xf32>
    %69 = arith.addf %68, %32 : vector<8x128xf32>
    %c0_35 = arith.constant 0 : index
    %c0_36 = arith.constant 0 : index
    %70 = vector.load %arg14[%c0_35, %c0_36] : memref<8x128xf32, #tpu.memory_space<vmem>>, vector<8x128xf32>
    tpu.vector_store %arg14[%c0_35, %c0_36], %69 {strides = array<i32>} : memref<8x128xf32, #tpu.memory_space<vmem>>, vector<8x128xf32>,
    return
  }
  func.func @transform_0(%arg0: i32) -> (i32, i32) {
    %c0_i32 = arith.constant 0 : i32
    %c0_i32_0 = arith.constant 0 : i32
    %c0_i32_1 = arith.constant 0 : i32
    return %c0_i32, %c0_i32_0 : i32, i32
  }
  func.func @transform_1(%arg0: i32) -> (i32, i32) {
    %c0_i32 = arith.constant 0 : i32
    %c0_i32_0 = arith.constant 0 : i32
    return %arg0, %c0_i32 : i32, i32
  }
  func.func @transform_2(%arg0: i32) -> (i32, i32) {
    %c0_i32 = arith.constant 0 : i32
    %c0_i32_0 = arith.constant 0 : i32
    %c0_i32_1 = arith.constant 0 : i32
    return %c0_i32, %c0_i32_0 : i32, i32
  }
  func.func @transform_3(%arg0: i32) -> (i32, i32) {
    %c0_i32 = arith.constant 0 : i32
    %c0_i32_0 = arith.constant 0 : i32
    %c0_i32_1 = arith.constant 0 : i32
    return %c0_i32, %c0_i32_0 : i32, i32
  }
  func.func @transform_4(%arg0: i32) -> (i32, i32) {
    %c0_i32 = arith.constant 0 : i32
    %c0_i32_0 = arith.constant 0 : i32
    %c0_i32_1 = arith.constant 0 : i32
    return %c0_i32, %c0_i32_0 : i32, i32
  }
  func.func @transform_5(%arg0: i32) -> (i32, i32) {
    %c0_i32 = arith.constant 0 : i32
    %c0_i32_0 = arith.constant 0 : i32
    %c0_i32_1 = arith.constant 0 : i32
    return %c0_i32, %c0_i32_0 : i32, i32
  }
  func.func @transform_6(%arg0: i32) -> (i32, i32) {
    %c0_i32 = arith.constant 0 : i32
    %c0_i32_0 = arith.constant 0 : i32
    %c0_i32_1 = arith.constant 0 : i32
    return %c0_i32, %c0_i32_0 : i32, i32
  }
  func.func @transform_7(%arg0: i32) -> (i32, i32) {
    %c0_i32 = arith.constant 0 : i32
    %c0_i32_0 = arith.constant 0 : i32
    %c0_i32_1 = arith.constant 0 : i32
    return %c0_i32, %c0_i32_0 : i32, i32
  }
  func.func @transform_8(%arg0: i32) -> (i32, i32) {
    %c0_i32 = arith.constant 0 : i32
    %c0_i32_0 = arith.constant 0 : i32
    %c0_i32_1 = arith.constant 0 : i32
    return %c0_i32, %c0_i32_0 : i32, i32
  }
  func.func @transform_9(%arg0: i32) -> (i32, i32) {
    %c0_i32 = arith.constant 0 : i32
    %c0_i32_0 = arith.constant 0 : i32
    %c0_i32_1 = arith.constant 0 : i32
    return %c0_i32, %c0_i32_0 : i32, i32
  }
  func.func @transform_10(%arg0: i32) -> (i32, i32) {
    %c0_i32 = arith.constant 0 : i32
    %c0_i32_0 = arith.constant 0 : i32
    %c0_i32_1 = arith.constant 0 : i32
    return %c0_i32, %c0_i32_0 : i32, i32
  }
  func.func @transform_11(%arg0: i32) -> (i32, i32) {
    %c0_i32 = arith.constant 0 : i32
    %c0_i32_0 = arith.constant 0 : i32
    %c0_i32_1 = arith.constant 0 : i32
    return %c0_i32, %c0_i32_0 : i32, i32
  }
  func.func @transform_12(%arg0: i32) -> (i32, i32) {
    %c0_i32 = arith.constant 0 : i32
    %c0_i32_0 = arith.constant 0 : i32
    %c0_i32_1 = arith.constant 0 : i32
    return %c0_i32, %c0_i32_0 : i32, i32
  }
  func.func @transform_13(%arg0: i32) -> (i32, i32) {
    %c0_i32 = arith.constant 0 : i32
    %c0_i32_0 = arith.constant 0 : i32
    return %arg0, %c0_i32 : i32, i32
  }
}

</mosaic_0001>

<llo_original>
// kernel: tpu_custom_call.1
$region0: #{tpu_custom_call.1}
  #allocation0 [shape = 'u32[]', space=smem, size = 0x4, offset = 0x4, fixed_abs, tag = 'smem constant byte address 0x4 - core index']
  #allocation1 [shape = 'u32[72,128]{1,0:T(1,128)}', space=vmem, size = 0x9000, scoped, tag = 'internal scratch']
  #allocation2 [shape = 'f32[1,1]{1,0:T(1,128)S(6)}', space=smem, size = 0x200, scoped, tag = 'scoped memory for tpu_custom_call.1']
  %s0 = inlined_call_operand.<no memory space> [shape: f32[1,1], index: 0, kind: input, shape index: {}]
  %s1 = inlined_call_operand.hbm [shape: f32[8,96], index: 1, kind: input, shape index: {}]
  %s2 = inlined_call_operand.hbm [shape: bf16[96,768], index: 2, kind: input, shape index: {}]
  %s3 = inlined_call_operand.hbm [shape: f32[1,512], index: 3, kind: input, shape index: {}]
  %s4 = inlined_call_operand.hbm [shape: bf16[512,384], index: 4, kind: input, shape index: {}]
  %s5 = inlined_call_operand.vmem [shape: f32[1,384], index: 5, kind: input, shape index: {}]
  %s6 = inlined_call_operand.hbm [shape: bf16[384,128], index: 6, kind: input, shape index: {}]
  %s7 = inlined_call_operand.vmem [shape: f32[1,128], index: 7, kind: input, shape index: {}]
  %s8 = inlined_call_operand.vmem [shape: f32[1,128], index: 8, kind: input, shape index: {}]
  %s9 = inlined_call_operand.hbm [shape: bf16[128,128], index: 9, kind: input, shape index: {}]
  %s10 = inlined_call_operand.vmem [shape: f32[1,128], index: 10, kind: input, shape index: {}]
  %s11 = inlined_call_operand.hbm [shape: bf16[128,128], index: 11, kind: input, shape index: {}]
  %s12 = inlined_call_operand.vmem [shape: f32[1,128], index: 12, kind: input, shape index: {}]
  %s13 = inlined_call_operand.hbm [shape: f32[8,128], index: 13, kind: output, shape index: {}]
  %s14 = sld [smem:[#allocation0]]
  $region90: #{tpu_custom_call.1} parent=0
    _
  %s16 = ssub.s32 1, %s14
  %s17 = scalar_select 0, %s16, %s14
  %18 = sst [smem:[#allocation2]] %s0
  $region1: #{tpu_custom_call.1} parent=0
    #allocation3 [shape = 'u8[4096]{0}', space=vmem, size = 0x1000, scoped, tag = 'input window, operand 1, single buffered']
    #allocation4 [shape = 's32[1]{0}', space=sflag, size = 0x4, scoped, tag = 'scoped memory for tpu_custom_call.1']
    #allocation5 [shape = 's32[1]{0}', space=sflag, size = 0x4, scoped, tag = 'scoped memory for tpu_custom_call.1']
    #allocation6 [shape = 'u8[147456]{0}', space=vmem, size = 0x24000, scoped, tag = 'input window, operand 2, single buffered']
    #allocation7 [shape = 's32[1]{0}', space=sflag, size = 0x4, scoped, tag = 'scoped memory for tpu_custom_call.1']
    #allocation8 [shape = 'u8[2048]{0}', space=vmem, size = 0x800, scoped, tag = 'input window, operand 3, single buffered']
    #allocation9 [shape = 'u8[393216]{0}', space=vmem, size = 0x60000, scoped, tag = 'input window, operand 4, single buffered']
    #allocation10 [shape = 's32[1]{0}', space=sflag, size = 0x4, scoped, tag = 'scoped memory for tpu_custom_call.1']
    #allocation11 [shape = 'u8[98304]{0}', space=vmem, size = 0x18000, scoped, tag = 'input window, operand 6, single buffered']
    #allocation12 [shape = 'u8[32768]{0}', space=vmem, size = 0x8000, scoped, tag = 'input window, operand 9, single buffered']
    #allocation13 [shape = 's32[1]{0}', space=sflag, size = 0x4, scoped, tag = 'scoped memory for tpu_custom_call.1']
    #allocation14 [shape = 'u8[32768]{0}', space=vmem, size = 0x8000, scoped, tag = 'input window, operand 11, single buffered']
    #allocation15 [shape = 'u8[4096]{0}', space=vmem, size = 0x1000, scoped, tag = 'output window, operand 0, single buffered']
    %19 = vsyncpa [#allocation4], 0
    %20 = vsyncpa [#allocation7], 0
    %21 = vsyncpa [#allocation10], 0
    %22 = vsyncpa [#allocation13], 0
    %23 = vsyncpa [#allocation5], 0
    // Predicated region
    $region2: #{tpu_custom_call.1} parent=1 // pred_check
      _
    $region3: #{tpu_custom_call.1} parent=1 // pred_check_branch
      %25 = sbr.rel (0) target = $region5
    $region4: #{tpu_custom_call.1} parent=1 // pred_region
      _
    $region5: #{tpu_custom_call.1} parent=1 // pred_fallthru
      _
    // Predicated region
    $region6: #{tpu_custom_call.1} parent=1 // pred_check
      _
    $region7: #{tpu_custom_call.1} parent=1 // pred_check_branch
      %27 = sbr.rel (0) target = $region9
    $region8: #{tpu_custom_call.1} parent=1 // pred_region
      %29 = vsyncadd [#allocation4], 0
      %s31 = sshll.u32 %s1, 4
      %s32 = int_to_ptr.hbm [resolvable:$true] %s31
      %s33 = sshll.u32 [#allocation3], 4
      %s34 = int_to_ptr.vmem [resolvable:$true] %s33
      %36 = dma.hbm_to_vmem [thread:$0]  %s32, 128, %s34, [#allocation4]
    $region9: #{tpu_custom_call.1} parent=1 // pred_fallthru
      _
    // Predicated region
    $region10: #{tpu_custom_call.1} parent=1 // pred_check
      _
    $region11: #{tpu_custom_call.1} parent=1 // pred_check_branch
      %38 = sbr.rel (0) target = $region13
    $region12: #{tpu_custom_call.1} parent=1 // pred_region
      %40 = vsyncadd [#allocation7], 0
      %s41 = sshll.u32 %s2, 4
      %s42 = int_to_ptr.hbm [resolvable:$true] %s41
      %s43 = sshll.u32 [#allocation6], 4
      %s44 = int_to_ptr.vmem [resolvable:$true] %s43
      %49 = dma.hbm_to_vmem [thread:$0]  %s42, 4608, %s44, [#allocation7], 384, 384, 24
    $region13: #{tpu_custom_call.1} parent=1 // pred_fallthru
      _
    // Predicated region
    $region14: #{tpu_custom_call.1} parent=1 // pred_check
      _
    $region15: #{tpu_custom_call.1} parent=1 // pred_check_branch
      %51 = sbr.rel (0) target = $region17
    $region16: #{tpu_custom_call.1} parent=1 // pred_region
      %53 = vsyncadd [#allocation7], 0
      %s55 = sshll.u32 %s3, 4
      %s56 = int_to_ptr.hbm [resolvable:$true] %s55
      %s57 = sshll.u32 [#allocation8], 4
      %s58 = int_to_ptr.vmem [resolvable:$true] %s57
      %60 = dma.hbm_to_vmem [thread:$0]  %s56, 64, %s58, [#allocation7]
    $region17: #{tpu_custom_call.1} parent=1 // pred_fallthru
      _
    // Predicated region
    $region18: #{tpu_custom_call.1} parent=1 // pred_check
      _
    $region19: #{tpu_custom_call.1} parent=1 // pred_check_branch
      %62 = sbr.rel (0) target = $region21
    $region20: #{tpu_custom_call.1} parent=1 // pred_region
      %64 = vsyncadd [#allocation10], 0
      %s65 = sshll.u32 %s4, 4
      %s66 = int_to_ptr.hbm [resolvable:$true] %s65
      %s67 = sshll.u32 [#allocation9], 4
      %s68 = int_to_ptr.vmem [resolvable:$true] %s67
      %73 = dma.hbm_to_vmem [thread:$0]  %s66, 12288, %s68, [#allocation10], 192, 192, 12
    $region21: #{tpu_custom_call.1} parent=1 // pred_fallthru
      _
    // Predicated region
    $region22: #{tpu_custom_call.1} parent=1 // pred_check
      _
    $region23: #{tpu_custom_call.1} parent=1 // pred_check_branch
      %75 = sbr.rel (0) target = $region25
    $region24: #{tpu_custom_call.1} parent=1 // pred_region
      _
    $region25: #{tpu_custom_call.1} parent=1 // pred_fallthru
      _
    // Predicated region
    $region26: #{tpu_custom_call.1} parent=1 // pred_check
      _
    $region27: #{tpu_custom_call.1} parent=1 // pred_check_branch
      %77 = sbr.rel (0) target = $region29
    $region28: #{tpu_custom_call.1} parent=1 // pred_region
      %79 = vsyncadd [#allocation10], 0
      %s80 = sshll.u32 %s6, 4
      %s81 = int_to_ptr.hbm [resolvable:$true] %s80
      %s82 = sshll.u32 [#allocation11], 4
      %s83 = int_to_ptr.vmem [resolvable:$true] %s82
      %88 = dma.hbm_to_vmem [thread:$0]  %s81, 3072, %s83, [#allocation10], 64, 64, 4
    $region29: #{tpu_custom_call.1} parent=1 // pred_fallthru
      _
    // Predicated region
    $region30: #{tpu_custom_call.1} parent=1 // pred_check
      _
    $region31: #{tpu_custom_call.1} parent=1 // pred_check_branch
      %90 = sbr.rel (0) target = $region33
    $region32: #{tpu_custom_call.1} parent=1 // pred_region
      _
    $region33: #{tpu_custom_call.1} parent=1 // pred_fallthru
      _
    // Predicated region
    $region34: #{tpu_custom_call.1} parent=1 // pred_check
      _
    $region35: #{tpu_custom_call.1} parent=1 // pred_check_branch
      %92 = sbr.rel (0) target = $region37
    $region36: #{tpu_custom_call.1} parent=1 // pred_region
      _
    $region37: #{tpu_custom_call.1} parent=1 // pred_fallthru
      _
    // Predicated region
    $region38: #{tpu_custom_call.1} parent=1 // pred_check
      _
    $region39: #{tpu_custom_call.1} parent=1 // pred_check_branch
      %94 = sbr.rel (0) target = $region41
    $region40: #{tpu_custom_call.1} parent=1 // pred_region
      %96 = vsyncadd [#allocation13], 0
      %s97 = sshll.u32 %s9, 4
      %s98 = int_to_ptr.hbm [resolvable:$true] %s97
      %s99 = sshll.u32 [#allocation12], 4
      %s100 = int_to_ptr.vmem [resolvable:$true] %s99
      %105 = dma.hbm_to_vmem [thread:$0]  %s98, 1024, %s100, [#allocation13], 64, 64, 4
    $region41: #{tpu_custom_call.1} parent=1 // pred_fallthru
      _
    // Predicated region
    $region42: #{tpu_custom_call.1} parent=1 // pred_check
      _
    $region43: #{tpu_custom_call.1} parent=1 // pred_check_branch
      %107 = sbr.rel (0) target = $region45
    $region44: #{tpu_custom_call.1} parent=1 // pred_region
      _
    $region45: #{tpu_custom_call.1} parent=1 // pred_fallthru
      _
    // Predicated region
    $region46: #{tpu_custom_call.1} parent=1 // pred_check
      _
    $region47: #{tpu_custom_call.1} parent=1 // pred_check_branch
      %109 = sbr.rel (0) target = $region49
    $region48: #{tpu_custom_call.1} parent=1 // pred_region
      %111 = vsyncadd [#allocation13], 0
      %s112 = sshll.u32 %s11, 4
      %s113 = int_to_ptr.hbm [resolvable:$true] %s112
      %s114 = sshll.u32 [#allocation14], 4
      %s115 = int_to_ptr.vmem [resolvable:$true] %s114
      %120 = dma.hbm_to_vmem [thread:$0]  %s113, 1024, %s115, [#allocation13], 64, 64, 4
    $region49: #{tpu_custom_call.1} parent=1 // pred_fallthru
      _
    // Predicated region
    $region50: #{tpu_custom_call.1} parent=1 // pred_check
      _
    $region51: #{tpu_custom_call.1} parent=1 // pred_check_branch
      %122 = sbr.rel (0) target = $region53
    $region52: #{tpu_custom_call.1} parent=1 // pred_region
      _
    $region53: #{tpu_custom_call.1} parent=1 // pred_fallthru
      _
    // Predicated region
    $region54: #{tpu_custom_call.1} parent=1 // pred_check
      _
    $region55: #{tpu_custom_call.1} parent=1 // pred_check_branch
      %124 = sbr.rel (0) target = $region57
    $region56: #{tpu_custom_call.1} parent=1 // pred_region
      %126 = dma.done [#allocation4], 128
    $region57: #{tpu_custom_call.1} parent=1 // pred_fallthru
      _
    // Predicated region
    $region58: #{tpu_custom_call.1} parent=1 // pred_check
      _
    $region59: #{tpu_custom_call.1} parent=1 // pred_check_branch
      %128 = sbr.rel (0) target = $region61
    $region60: #{tpu_custom_call.1} parent=1 // pred_region
      %130 = dma.done [#allocation7], 4608
    $region61: #{tpu_custom_call.1} parent=1 // pred_fallthru
      _
    // Predicated region
    $region62: #{tpu_custom_call.1} parent=1 // pred_check
      _
    $region63: #{tpu_custom_call.1} parent=1 // pred_check_branch
      %132 = sbr.rel (0) target = $region65
    $region64: #{tpu_custom_call.1} parent=1 // pred_region
      %134 = dma.done [#allocation7], 64
    $region65: #{tpu_custom_call.1} parent=1 // pred_fallthru
      _
    // Predicated region
    $region66: #{tpu_custom_call.1} parent=1 // pred_check
      _
    $region67: #{tpu_custom_call.1} parent=1 // pred_check_branch
      %136 = sbr.rel (0) target = $region69
    $region68: #{tpu_custom_call.1} parent=1 // pred_region
      %138 = dma.done [#allocation10], 12288
    $region69: #{tpu_custom_call.1} parent=1 // pred_fallthru
      _
    // Predicated region
    $region70: #{tpu_custom_call.1} parent=1 // pred_check
      _
    $region71: #{tpu_custom_call.1} parent=1 // pred_check_branch
      %140 = sbr.rel (0) target = $region73
    $region72: #{tpu_custom_call.1} parent=1 // pred_region
      %142 = dma.done [#allocation10], 3072
    $region73: #{tpu_custom_call.1} parent=1 // pred_fallthru
      _
    // Predicated region
    $region74: #{tpu_custom_call.1} parent=1 // pred_check
      _
    $region75: #{tpu_custom_call.1} parent=1 // pred_check_branch
      %144 = sbr.rel (0) target = $region77
    $region76: #{tpu_custom_call.1} parent=1 // pred_region
      %146 = dma.done [#allocation13], 1024
    $region77: #{tpu_custom_call.1} parent=1 // pred_fallthru
      _
    // Predicated region
    $region78: #{tpu_custom_call.1} parent=1 // pred_check
      _
    $region79: #{tpu_custom_call.1} parent=1 // pred_check_branch
      %148 = sbr.rel (0) target = $region81
    $region80: #{tpu_custom_call.1} parent=1 // pred_region
      %150 = dma.done [#allocation13], 1024
    $region81: #{tpu_custom_call.1} parent=1 // pred_fallthru
      _
    %s152 = sld [smem:[#allocation2]]
    %v153 = vld [vmem:[#allocation3] sm:$0xff]
    %v154 = vlaneseq
    %v155 = vand.u32 %v154, 127
    %vm156 = vcmp.lt.s32.totalorder %v155, 64
    %v157 = vtanh.pop %v153
    %v158 = vsel %vm156, %v157, %v153
    %v159 = vpack.c.bf16 %v158, %v158
    %v160 = vld [vmem:[#allocation6] sm:$0xff]
    %v161 = vld [vmem:[#allocation6 + $0x8] sm:$0xff]
    %v162 = vld [vmem:[#allocation6 + $0x10] sm:$0xff]
    %v163 = vld [vmem:[#allocation6 + $0x18] sm:$0xff]
    %v164 = vld [vmem:[#allocation6 + $0x20] sm:$0xff]
    %v165 = vld [vmem:[#allocation6 + $0x28] sm:$0xff]
    %v166 = vld [vmem:[#allocation6 + $0x30] sm:$0xff]
    %v167 = vld [vmem:[#allocation6 + $0x38] sm:$0xff]
    %v168 = vld [vmem:[#allocation6 + $0x40] sm:$0xff]
    %v169 = vld [vmem:[#allocation6 + $0x48] sm:$0xff]
    %v170 = vld [vmem:[#allocation6 + $0x50] sm:$0xff]
    %v171 = vld [vmem:[#allocation6 + $0x58] sm:$0xff]
    %v172 = vld [vmem:[#allocation6 + $0x60] sm:$0xff]
    %v173 = vld [vmem:[#allocation6 + $0x68] sm:$0xff]
    %v174 = vld [vmem:[#allocation6 + $0x70] sm:$0xff]
    %v175 = vld [vmem:[#allocation6 + $0x78] sm:$0xff]
    %v176 = vld [vmem:[#allocation6 + $0x80] sm:$0xff]
    %v177 = vld [vmem:[#allocation6 + $0x88] sm:$0xff]
    %v178 = vld [vmem:[#allocation6 + $0x90] sm:$0xff]
    %v179 = vld [vmem:[#allocation6 + $0x98] sm:$0xff]
    %v180 = vld [vmem:[#allocation6 + $0xa0] sm:$0xff]
    %v181 = vld [vmem:[#allocation6 + $0xa8] sm:$0xff]
    %v182 = vld [vmem:[#allocation6 + $0xb0] sm:$0xff]
    %v183 = vld [vmem:[#allocation6 + $0xb8] sm:$0xff]
    %v184 = vld [vmem:[#allocation6 + $0xc0] sm:$0xff]
    %v185 = vld [vmem:[#allocation6 + $0xc8] sm:$0xff]
    %v186 = vld [vmem:[#allocation6 + $0xd0] sm:$0xff]
    %v187 = vld [vmem:[#allocation6 + $0xd8] sm:$0xff]
    %v188 = vld [vmem:[#allocation6 + $0xe0] sm:$0xff]
    %v189 = vld [vmem:[#allocation6 + $0xe8] sm:$0xff]
    %v190 = vld [vmem:[#allocation6 + $0xf0] sm:$0xff]
    %v191 = vld [vmem:[#allocation6 + $0xf8] sm:$0xff]
    %v192 = vld [vmem:[#allocation6 + $0x100] sm:$0xff]
    %v193 = vld [vmem:[#allocation6 + $0x108] sm:$0xff]
    %v194 = vld [vmem:[#allocation6 + $0x110] sm:$0xff]
    %v195 = vld [vmem:[#allocation6 + $0x118] sm:$0xff]
    %v232 = vunpack.c.l.b16 %v160
    %v233 = vunpack.c.h.b16 %v160
    %v234 = vunpack.c.l.b16 %v161
    %v235 = vunpack.c.h.b16 %v161
    %v236 = vunpack.c.l.b16 %v162
    %v237 = vunpack.c.h.b16 %v162
    %v238 = vunpack.c.l.b16 %v163
    %v239 = vunpack.c.h.b16 %v163
    %v240 = vunpack.c.l.b16 %v164
    %v241 = vunpack.c.h.b16 %v164
    %v242 = vunpack.c.l.b16 %v165
    %v243 = vunpack.c.h.b16 %v165
    %v244 = vunpack.c.l.b16 %v166
    %v245 = vunpack.c.h.b16 %v166
    %v246 = vunpack.c.l.b16 %v167
    %v247 = vunpack.c.h.b16 %v167
    %v248 = vunpack.c.l.b16 %v168
    %v249 = vunpack.c.h.b16 %v168
    %v250 = vunpack.c.l.b16 %v169
    %v251 = vunpack.c.h.b16 %v169
    %v252 = vunpack.c.l.b16 %v170
    %v253 = vunpack.c.h.b16 %v170
    %v254 = vunpack.c.l.b16 %v171
    %v255 = vunpack.c.h.b16 %v171
    %v256 = vunpack.c.l.b16 %v172
    %v257 = vunpack.c.h.b16 %v172
    %v258 = vunpack.c.l.b16 %v173
    %v259 = vunpack.c.h.b16 %v173
    %v260 = vunpack.c.l.b16 %v174
    %v261 = vunpack.c.h.b16 %v174
    %v262 = vunpack.c.l.b16 %v175
    %v263 = vunpack.c.h.b16 %v175
    %v264 = vunpack.c.l.b16 %v176
    %v265 = vunpack.c.h.b16 %v176
    %v266 = vunpack.c.l.b16 %v177
    %v267 = vunpack.c.h.b16 %v177
    %v268 = vunpack.c.l.b16 %v178
    %v269 = vunpack.c.h.b16 %v178
    %v270 = vunpack.c.l.b16 %v179
    %v271 = vunpack.c.h.b16 %v179
    %v272 = vunpack.c.l.b16 %v180
    %v273 = vunpack.c.h.b16 %v180
    %v274 = vunpack.c.l.b16 %v181
    %v275 = vunpack.c.h.b16 %v181
    %v276 = vunpack.c.l.b16 %v182
    %v277 = vunpack.c.h.b16 %v182
    %v278 = vunpack.c.l.b16 %v183
    %v279 = vunpack.c.h.b16 %v183
    %v280 = vunpack.c.l.b16 %v184
    %v281 = vunpack.c.h.b16 %v184
    %v282 = vunpack.c.l.b16 %v185
    %v283 = vunpack.c.h.b16 %v185
    %v284 = vunpack.c.l.b16 %v186
    %v285 = vunpack.c.h.b16 %v186
    %v286 = vunpack.c.l.b16 %v187
    %v287 = vunpack.c.h.b16 %v187
    %v288 = vunpack.c.l.b16 %v188
    %v289 = vunpack.c.h.b16 %v188
    %v290 = vunpack.c.l.b16 %v189
    %v291 = vunpack.c.h.b16 %v189
    %v292 = vunpack.c.l.b16 %v190
    %v293 = vunpack.c.h.b16 %v190
    %v294 = vunpack.c.l.b16 %v191
    %v295 = vunpack.c.h.b16 %v191
    %v296 = vunpack.c.l.b16 %v192
    %v297 = vunpack.c.h.b16 %v192
    %v298 = vunpack.c.l.b16 %v193
    %v299 = vunpack.c.h.b16 %v193
    %v300 = vunpack.c.l.b16 %v194
    %v301 = vunpack.c.h.b16 %v194
    %v302 = vunpack.c.l.b16 %v195
    %v303 = vunpack.c.h.b16 %v195
    %v304 = vpack.c.b16 %v238, %v232
    %v305 = vpack.c.b16 %v239, %v233
    %v306 = vpack.c.b16 %v240, %v234
    %v307 = vpack.c.b16 %v241, %v235
    %v308 = vpack.c.b16 %v242, %v236
    %v309 = vpack.c.b16 %v243, %v237
    %v310 = vpack.c.b16 %v250, %v244
    %v311 = vpack.c.b16 %v251, %v245
    %v312 = vpack.c.b16 %v252, %v246
    %v313 = vpack.c.b16 %v253, %v247
    %v314 = vpack.c.b16 %v254, %v248
    %v315 = vpack.c.b16 %v255, %v249
    %v316 = vpack.c.b16 %v262, %v256
    %v317 = vpack.c.b16 %v263, %v257
    %v318 = vpack.c.b16 %v264, %v258
    %v319 = vpack.c.b16 %v265, %v259
    %v320 = vpack.c.b16 %v266, %v260
    %v321 = vpack.c.b16 %v267, %v261
    %v322 = vpack.c.b16 %v274, %v268
    %v323 = vpack.c.b16 %v275, %v269
    %v324 = vpack.c.b16 %v276, %v270
    %v325 = vpack.c.b16 %v277, %v271
    %v326 = vpack.c.b16 %v278, %v272
    %v327 = vpack.c.b16 %v279, %v273
    %v328 = vpack.c.b16 %v286, %v280
    %v329 = vpack.c.b16 %v287, %v281
    %v330 = vpack.c.b16 %v288, %v282
    %v331 = vpack.c.b16 %v289, %v283
    %v332 = vpack.c.b16 %v290, %v284
    %v333 = vpack.c.b16 %v291, %v285
    %v334 = vpack.c.b16 %v298, %v292
    %v335 = vpack.c.b16 %v299, %v293
    %v336 = vpack.c.b16 %v300, %v294
    %v337 = vpack.c.b16 %v301, %v295
    %v338 = vpack.c.b16 %v302, %v296
    %v339 = vpack.c.b16 %v303, %v297
    %vm376 = vcmask 785408
    %v378 = vsel %vm376, %v159, 0
    %380 = vmatpush.bf16.msra.mxu0 0
    %381 = vmatpush.bf16.msra.mxu0 0
    %382 = vmatpush.bf16.msra.mxu0 %v334
    %383 = vmatpush.bf16.msra.mxu0 %v328
    %384 = vmatpush.bf16.msra.mxu0 %v322
    %385 = vmatpush.bf16.msra.mxu0 %v316
    %386 = vmatpush.bf16.msra.mxu0 %v310
    %387 = vmatpush.bf16.msra.mxu0 %v304
    %388 = vmatmul.bf16.gmra.mxu0 %v378
    %v389 = vpop.f32.mrf.mxu0
    %v390 = vadd.f32 0.0, %v389
    %v391 = vpop.f32.mrf.mxu0
    %392 = vdwg.mxu0
    %393 = vmatpush.bf16.msra.mxu0 0
    %394 = vmatpush.bf16.msra.mxu0 0
    %395 = vmatpush.bf16.msra.mxu0 %v335
    %396 = vmatpush.bf16.msra.mxu0 %v329
    %397 = vmatpush.bf16.msra.mxu0 %v323
    %398 = vmatpush.bf16.msra.mxu0 %v317
    %399 = vmatpush.bf16.msra.mxu0 %v311
    %400 = vmatpush.bf16.msra.mxu0 %v305
    %401 = vmatmul.bf16.gmra.mxu0 %v378
    %v402 = vpop.f32.mrf.mxu0
    %v403 = vadd.f32 0.0, %v402
    %v404 = vpop.f32.mrf.mxu0
    %405 = vdwg.mxu0
    %406 = vmatpush.bf16.msra.mxu0 0
    %407 = vmatpush.bf16.msra.mxu0 0
    %408 = vmatpush.bf16.msra.mxu0 %v336
    %409 = vmatpush.bf16.msra.mxu0 %v330
    %410 = vmatpush.bf16.msra.mxu0 %v324
    %411 = vmatpush.bf16.msra.mxu0 %v318
    %412 = vmatpush.bf16.msra.mxu0 %v312
    %413 = vmatpush.bf16.msra.mxu0 %v306
    %414 = vmatmul.bf16.gmra.mxu0 %v378
    %v415 = vpop.f32.mrf.mxu0
    %v416 = vadd.f32 0.0, %v415
    %v417 = vpop.f32.mrf.mxu0
    %418 = vdwg.mxu0
    %419 = vmatpush.bf16.msra.mxu0 0
    %420 = vmatpush.bf16.msra.mxu0 0
    %421 = vmatpush.bf16.msra.mxu0 %v337
    %422 = vmatpush.bf16.msra.mxu0 %v331
    %423 = vmatpush.bf16.msra.mxu0 %v325
    %424 = vmatpush.bf16.msra.mxu0 %v319
    %425 = vmatpush.bf16.msra.mxu0 %v313
    %426 = vmatpush.bf16.msra.mxu0 %v307
    %427 = vmatmul.bf16.gmra.mxu0 %v378
    %v428 = vpop.f32.mrf.mxu0
    %v429 = vadd.f32 0.0, %v428
    %v430 = vpop.f32.mrf.mxu0
    %431 = vdwg.mxu0
    %432 = vmatpush.bf16.msra.mxu0 0
    %433 = vmatpush.bf16.msra.mxu0 0
    %434 = vmatpush.bf16.msra.mxu0 %v338
    %435 = vmatpush.bf16.msra.mxu0 %v332
    %436 = vmatpush.bf16.msra.mxu0 %v326
    %437 = vmatpush.bf16.msra.mxu0 %v320
    %438 = vmatpush.bf16.msra.mxu0 %v314
    %439 = vmatpush.bf16.msra.mxu0 %v308
    %440 = vmatmul.bf16.gmra.mxu0 %v378
    %v441 = vpop.f32.mrf.mxu0
    %v442 = vadd.f32 0.0, %v441
    %v443 = vpop.f32.mrf.mxu0
    %444 = vdwg.mxu0
    %445 = vmatpush.bf16.msra.mxu0 0
    %446 = vmatpush.bf16.msra.mxu0 0
    %447 = vmatpush.bf16.msra.mxu0 %v339
    %448 = vmatpush.bf16.msra.mxu0 %v333
    %449 = vmatpush.bf16.msra.mxu0 %v327
    %450 = vmatpush.bf16.msra.mxu0 %v321
    %451 = vmatpush.bf16.msra.mxu0 %v315
    %452 = vmatpush.bf16.msra.mxu0 %v309
    %453 = vmatmul.bf16.gmra.mxu0 %v378
    %v454 = vpop.f32.mrf.mxu0
    %v455 = vadd.f32 0.0, %v454
    %v456 = vpop.f32.mrf.mxu0
    %457 = vdwg.mxu0
    %v458 = vld [vmem:[#allocation8] sm:$0xf]
    %v460 = vperm.slane %v458, 0
    %v461 = vperm.slane %v458, 1
    %v462 = vperm.slane %v458, 2
    %v463 = vperm.slane %v458, 3
    %v468 = vadd.f32 %v390, %v460
    %v469 = vadd.f32 %v403, %v461
    %v470 = vadd.f32 %v416, %v462
    %v471 = vadd.f32 %v429, %v463
    %v472 = vmax.f32 %v468, 0.0
    %v473 = vmax.f32 %v469, 0.0
    %v474 = vmax.f32 %v470, 0.0
    %v475 = vmax.f32 %v471, 0.0
    %v476 = vpack.c.bf16 %v472, %v472
    %v477 = vpack.c.bf16 %v473, %v473
    %v478 = vpack.c.bf16 %v474, %v474
    %v479 = vpack.c.bf16 %v475, %v475
    %v480 = vld [vmem:[#allocation9] sm:$0xff]
    %v481 = vld [vmem:[#allocation9 + $0x8] sm:$0xf]
    %v482 = vld [vmem:[#allocation9 + $0xc] sm:$0xff]
    %v483 = vld [vmem:[#allocation9 + $0x14] sm:$0xf]
    %v484 = vld [vmem:[#allocation9 + $0x18] sm:$0xff]
    %v485 = vld [vmem:[#allocation9 + $0x20] sm:$0xf]
    %v486 = vld [vmem:[#allocation9 + $0x24] sm:$0xff]
    %v487 = vld [vmem:[#allocation9 + $0x2c] sm:$0xf]
    %v488 = vld [vmem:[#allocation9 + $0x30] sm:$0xff]
    %v489 = vld [vmem:[#allocation9 + $0x38] sm:$0xf]
    %v490 = vld [vmem:[#allocation9 + $0x3c] sm:$0xff]
    %v491 = vld [vmem:[#allocation9 + $0x44] sm:$0xf]
    %v492 = vld [vmem:[#allocation9 + $0x48] sm:$0xff]
    %v493 = vld [vmem:[#allocation9 + $0x50] sm:$0xf]
    %v494 = vld [vmem:[#allocation9 + $0x54] sm:$0xff]
    %v495 = vld [vmem:[#allocation9 + $0x5c] sm:$0xf]
    %v496 = vld [vmem:[#allocation9 + $0x60] sm:$0xff]
    %v497 = vld [vmem:[#allocation9 + $0x68] sm:$0xf]
    %v498 = vld [vmem:[#allocation9 + $0x6c] sm:$0xff]
    %v499 = vld [vmem:[#allocation9 + $0x74] sm:$0xf]
    %v500 = vld [vmem:[#allocation9 + $0x78] sm:$0xff]
    %v501 = vld [vmem:[#allocation9 + $0x80] sm:$0xf]
    %v502 = vld [vmem:[#allocation9 + $0x84] sm:$0xff]
    %v503 = vld [vmem:[#allocation9 + $0x8c] sm:$0xf]
    %v504 = vld [vmem:[#allocation9 + $0x90] sm:$0xff]
    %v505 = vld [vmem:[#allocation9 + $0x98] sm:$0xf]
    %v506 = vld [vmem:[#allocation9 + $0x9c] sm:$0xff]
    %v507 = vld [vmem:[#allocation9 + $0xa4] sm:$0xf]
    %v508 = vld [vmem:[#allocation9 + $0xa8] sm:$0xff]
    %v509 = vld [vmem:[#allocation9 + $0xb0] sm:$0xf]
    %v510 = vld [vmem:[#allocation9 + $0xb4] sm:$0xff]
    %v511 = vld [vmem:[#allocation9 + $0xbc] sm:$0xf]
    %v512 = vld [vmem:[#allocation9 + $0xc0] sm:$0xff]
    %v513 = vld [vmem:[#allocation9 + $0xc8] sm:$0xf]
    %v514 = vld [vmem:[#allocation9 + $0xcc] sm:$0xff]
    %v515 = vld [vmem:[#allocation9 + $0xd4] sm:$0xf]
    %v516 = vld [vmem:[#allocation9 + $0xd8] sm:$0xff]
    %v517 = vld [vmem:[#allocation9 + $0xe0] sm:$0xf]
    %v518 = vld [vmem:[#allocation9 + $0xe4] sm:$0xff]
    %v519 = vld [vmem:[#allocation9 + $0xec] sm:$0xf]
    %v520 = vld [vmem:[#allocation9 + $0xf0] sm:$0xff]
    %v521 = vld [vmem:[#allocation9 + $0xf8] sm:$0xf]
    %v522 = vld [vmem:[#allocation9 + $0xfc] sm:$0xff]
    %v523 = vld [vmem:[#allocation9 + $0x104] sm:$0xf]
    %v524 = vld [vmem:[#allocation9 + $0x108] sm:$0xff]
    %v525 = vld [vmem:[#allocation9 + $0x110] sm:$0xf]
    %v526 = vld [vmem:[#allocation9 + $0x114] sm:$0xff]
    %v527 = vld [vmem:[#allocation9 + $0x11c] sm:$0xf]
    %v528 = vld [vmem:[#allocation9 + $0x120] sm:$0xff]
    %v529 = vld [vmem:[#allocation9 + $0x128] sm:$0xf]
    %v530 = vld [vmem:[#allocation9 + $0x12c] sm:$0xff]
    %v531 = vld [vmem:[#allocation9 + $0x134] sm:$0xf]
    %v532 = vld [vmem:[#allocation9 + $0x138] sm:$0xff]
    %v533 = vld [vmem:[#allocation9 + $0x140] sm:$0xf]
    %v534 = vld [vmem:[#allocation9 + $0x144] sm:$0xff]
    %v535 = vld [vmem:[#allocation9 + $0x14c] sm:$0xf]
    %v536 = vld [vmem:[#allocation9 + $0x150] sm:$0xff]
    %v537 = vld [vmem:[#allocation9 + $0x158] sm:$0xf]
    %v538 = vld [vmem:[#allocation9 + $0x15c] sm:$0xff]
    %v539 = vld [vmem:[#allocation9 + $0x164] sm:$0xf]
    %v540 = vld [vmem:[#allocation9 + $0x168] sm:$0xff]
    %v541 = vld [vmem:[#allocation9 + $0x170] sm:$0xf]
    %v542 = vld [vmem:[#allocation9 + $0x174] sm:$0xff]
    %v543 = vld [vmem:[#allocation9 + $0x17c] sm:$0xf]
    %v544 = vld [vmem:[#allocation9 + $0x180] sm:$0xff]
    %v545 = vld [vmem:[#allocation9 + $0x188] sm:$0xf]
    %v546 = vld [vmem:[#allocation9 + $0x18c] sm:$0xff]
    %v547 = vld [vmem:[#allocation9 + $0x194] sm:$0xf]
    %v548 = vld [vmem:[#allocation9 + $0x198] sm:$0xff]
    %v549 = vld [vmem:[#allocation9 + $0x1a0] sm:$0xf]
    %v550 = vld [vmem:[#allocation9 + $0x1a4] sm:$0xff]
    %v551 = vld [vmem:[#allocation9 + $0x1ac] sm:$0xf]
    %v552 = vld [vmem:[#allocation9 + $0x1b0] sm:$0xff]
    %v553 = vld [vmem:[#allocation9 + $0x1b8] sm:$0xf]
    %v554 = vld [vmem:[#allocation9 + $0x1bc] sm:$0xff]
    %v555 = vld [vmem:[#allocation9 + $0x1c4] sm:$0xf]
    %v556 = vld [vmem:[#allocation9 + $0x1c8] sm:$0xff]
    %v557 = vld [vmem:[#allocation9 + $0x1d0] sm:$0xf]
    %v558 = vld [vmem:[#allocation9 + $0x1d4] sm:$0xff]
    %v559 = vld [vmem:[#allocation9 + $0x1dc] sm:$0xf]
    %v560 = vld [vmem:[#allocation9 + $0x1e0] sm:$0xff]
    %v561 = vld [vmem:[#allocation9 + $0x1e8] sm:$0xf]
    %v562 = vld [vmem:[#allocation9 + $0x1ec] sm:$0xff]
    %v563 = vld [vmem:[#allocation9 + $0x1f4] sm:$0xf]
    %v564 = vld [vmem:[#allocation9 + $0x1f8] sm:$0xff]
    %v565 = vld [vmem:[#allocation9 + $0x200] sm:$0xf]
    %v566 = vld [vmem:[#allocation9 + $0x204] sm:$0xff]
    %v567 = vld [vmem:[#allocation9 + $0x20c] sm:$0xf]
    %v568 = vld [vmem:[#allocation9 + $0x210] sm:$0xff]
    %v569 = vld [vmem:[#allocation9 + $0x218] sm:$0xf]
    %v570 = vld [vmem:[#allocation9 + $0x21c] sm:$0xff]
    %v571 = vld [vmem:[#allocation9 + $0x224] sm:$0xf]
    %v572 = vld [vmem:[#allocation9 + $0x228] sm:$0xff]
    %v573 = vld [vmem:[#allocation9 + $0x230] sm:$0xf]
    %v574 = vld [vmem:[#allocation9 + $0x234] sm:$0xff]
    %v575 = vld [vmem:[#allocation9 + $0x23c] sm:$0xf]
    %v576 = vld [vmem:[#allocation9 + $0x240] sm:$0xff]
    %v577 = vld [vmem:[#allocation9 + $0x248] sm:$0xf]
    %v578 = vld [vmem:[#allocation9 + $0x24c] sm:$0xff]
    %v579 = vld [vmem:[#allocation9 + $0x254] sm:$0xf]
    %v580 = vld [vmem:[#allocation9 + $0x258] sm:$0xff]
    %v581 = vld [vmem:[#allocation9 + $0x260] sm:$0xf]
    %v582 = vld [vmem:[#allocation9 + $0x264] sm:$0xff]
    %v583 = vld [vmem:[#allocation9 + $0x26c] sm:$0xf]
    %v584 = vld [vmem:[#allocation9 + $0x270] sm:$0xff]
    %v585 = vld [vmem:[#allocation9 + $0x278] sm:$0xf]
    %v586 = vld [vmem:[#allocation9 + $0x27c] sm:$0xff]
    %v587 = vld [vmem:[#allocation9 + $0x284] sm:$0xf]
    %v588 = vld [vmem:[#allocation9 + $0x288] sm:$0xff]
    %v589 = vld [vmem:[#allocation9 + $0x290] sm:$0xf]
    %v590 = vld [vmem:[#allocation9 + $0x294] sm:$0xff]
    %v591 = vld [vmem:[#allocation9 + $0x29c] sm:$0xf]
    %v592 = vld [vmem:[#allocation9 + $0x2a0] sm:$0xff]
    %v593 = vld [vmem:[#allocation9 + $0x2a8] sm:$0xf]
    %v594 = vld [vmem:[#allocation9 + $0x2ac] sm:$0xff]
    %v595 = vld [vmem:[#allocation9 + $0x2b4] sm:$0xf]
    %v596 = vld [vmem:[#allocation9 + $0x2b8] sm:$0xff]
    %v597 = vld [vmem:[#allocation9 + $0x2c0] sm:$0xf]
    %v598 = vld [vmem:[#allocation9 + $0x2c4] sm:$0xff]
    %v599 = vld [vmem:[#allocation9 + $0x2cc] sm:$0xf]
    %v600 = vld [vmem:[#allocation9 + $0x2d0] sm:$0xff]
    %v601 = vld [vmem:[#allocation9 + $0x2d8] sm:$0xf]
    %v602 = vld [vmem:[#allocation9 + $0x2dc] sm:$0xff]
    %v603 = vld [vmem:[#allocation9 + $0x2e4] sm:$0xf]
    %v604 = vld [vmem:[#allocation9 + $0x2e8] sm:$0xff]
    %v605 = vld [vmem:[#allocation9 + $0x2f0] sm:$0xf]
    %v606 = vld [vmem:[#allocation9 + $0x2f4] sm:$0xff]
    %v607 = vld [vmem:[#allocation9 + $0x2fc] sm:$0xf]
    %v608 = vld [vmem:[%s5] sm:$0x7]
    %v610 = vperm.slane %v608, 0
    %v611 = vperm.slane %v608, 1
    %v612 = vperm.slane %v608, 2
    %v744 = vunpack.c.l.b16 %v480
    %v745 = vunpack.c.h.b16 %v480
    %v746 = vunpack.c.l.b16 %v481
    %v747 = vunpack.c.l.b16 %v482
    %v748 = vunpack.c.h.b16 %v482
    %v749 = vunpack.c.l.b16 %v483
    %v750 = vunpack.c.l.b16 %v484
    %v751 = vunpack.c.h.b16 %v484
    %v752 = vunpack.c.l.b16 %v485
    %v753 = vunpack.c.l.b16 %v486
    %v754 = vunpack.c.h.b16 %v486
    %v755 = vunpack.c.l.b16 %v487
    %v756 = vunpack.c.l.b16 %v488
    %v757 = vunpack.c.h.b16 %v488
    %v758 = vunpack.c.l.b16 %v489
    %v759 = vunpack.c.l.b16 %v490
    %v760 = vunpack.c.h.b16 %v490
    %v761 = vunpack.c.l.b16 %v491
    %v762 = vunpack.c.l.b16 %v492
    %v763 = vunpack.c.h.b16 %v492
    %v764 = vunpack.c.l.b16 %v493
    %v765 = vunpack.c.l.b16 %v494
    %v766 = vunpack.c.h.b16 %v494
    %v767 = vunpack.c.l.b16 %v495
    %v768 = vunpack.c.l.b16 %v496
    %v769 = vunpack.c.h.b16 %v496
    %v770 = vunpack.c.l.b16 %v497
    %v771 = vunpack.c.l.b16 %v498
    %v772 = vunpack.c.h.b16 %v498
    %v773 = vunpack.c.l.b16 %v499
    %v774 = vunpack.c.l.b16 %v500
    %v775 = vunpack.c.h.b16 %v500
    %v776 = vunpack.c.l.b16 %v501
    %v777 = vunpack.c.l.b16 %v502
    %v778 = vunpack.c.h.b16 %v502
    %v779 = vunpack.c.l.b16 %v503
    %v780 = vunpack.c.l.b16 %v504
    %v781 = vunpack.c.h.b16 %v504
    %v782 = vunpack.c.l.b16 %v505
    %v783 = vunpack.c.l.b16 %v506
    %v784 = vunpack.c.h.b16 %v506
    %v785 = vunpack.c.l.b16 %v507
    %v786 = vunpack.c.l.b16 %v508
    %v787 = vunpack.c.h.b16 %v508
    %v788 = vunpack.c.l.b16 %v509
    %v789 = vunpack.c.l.b16 %v510
    %v790 = vunpack.c.h.b16 %v510
    %v791 = vunpack.c.l.b16 %v511
    %v792 = vunpack.c.l.b16 %v512
    %v793 = vunpack.c.h.b16 %v512
    %v794 = vunpack.c.l.b16 %v513
    %v795 = vunpack.c.l.b16 %v514
    %v796 = vunpack.c.h.b16 %v514
    %v797 = vunpack.c.l.b16 %v515
    %v798 = vunpack.c.l.b16 %v516
    %v799 = vunpack.c.h.b16 %v516
    %v800 = vunpack.c.l.b16 %v517
    %v801 = vunpack.c.l.b16 %v518
    %v802 = vunpack.c.h.b16 %v518
    %v803 = vunpack.c.l.b16 %v519
    %v804 = vunpack.c.l.b16 %v520
    %v805 = vunpack.c.h.b16 %v520
    %v806 = vunpack.c.l.b16 %v521
    %v807 = vunpack.c.l.b16 %v522
    %v808 = vunpack.c.h.b16 %v522
    %v809 = vunpack.c.l.b16 %v523
    %v810 = vunpack.c.l.b16 %v524
    %v811 = vunpack.c.h.b16 %v524
    %v812 = vunpack.c.l.b16 %v525
    %v813 = vunpack.c.l.b16 %v526
    %v814 = vunpack.c.h.b16 %v526
    %v815 = vunpack.c.l.b16 %v527
    %v816 = vunpack.c.l.b16 %v528
    %v817 = vunpack.c.h.b16 %v528
    %v818 = vunpack.c.l.b16 %v529
    %v819 = vunpack.c.l.b16 %v530
    %v820 = vunpack.c.h.b16 %v530
    %v821 = vunpack.c.l.b16 %v531
    %v822 = vunpack.c.l.b16 %v532
    %v823 = vunpack.c.h.b16 %v532
    %v824 = vunpack.c.l.b16 %v533
    %v825 = vunpack.c.l.b16 %v534
    %v826 = vunpack.c.h.b16 %v534
    %v827 = vunpack.c.l.b16 %v535
    %v828 = vunpack.c.l.b16 %v536
    %v829 = vunpack.c.h.b16 %v536
    %v830 = vunpack.c.l.b16 %v537
    %v831 = vunpack.c.l.b16 %v538
    %v832 = vunpack.c.h.b16 %v538
    %v833 = vunpack.c.l.b16 %v539
    %v834 = vunpack.c.l.b16 %v540
    %v835 = vunpack.c.h.b16 %v540
    %v836 = vunpack.c.l.b16 %v541
    %v837 = vunpack.c.l.b16 %v542
    %v838 = vunpack.c.h.b16 %v542
    %v839 = vunpack.c.l.b16 %v543
    %v840 = vunpack.c.l.b16 %v544
    %v841 = vunpack.c.h.b16 %v544
    %v842 = vunpack.c.l.b16 %v545
    %v843 = vunpack.c.l.b16 %v546
    %v844 = vunpack.c.h.b16 %v546
    %v845 = vunpack.c.l.b16 %v547
    %v846 = vunpack.c.l.b16 %v548
    %v847 = vunpack.c.h.b16 %v548
    %v848 = vunpack.c.l.b16 %v549
    %v849 = vunpack.c.l.b16 %v550
    %v850 = vunpack.c.h.b16 %v550
    %v851 = vunpack.c.l.b16 %v551
    %v852 = vunpack.c.l.b16 %v552
    %v853 = vunpack.c.h.b16 %v552
    %v854 = vunpack.c.l.b16 %v553
    %v855 = vunpack.c.l.b16 %v554
    %v856 = vunpack.c.h.b16 %v554
    %v857 = vunpack.c.l.b16 %v555
    %v858 = vunpack.c.l.b16 %v556
    %v859 = vunpack.c.h.b16 %v556
    %v860 = vunpack.c.l.b16 %v557
    %v861 = vunpack.c.l.b16 %v558
    %v862 = vunpack.c.h.b16 %v558
    %v863 = vunpack.c.l.b16 %v559
    %v864 = vunpack.c.l.b16 %v560
    %v865 = vunpack.c.h.b16 %v560
    %v866 = vunpack.c.l.b16 %v561
    %v867 = vunpack.c.l.b16 %v562
    %v868 = vunpack.c.h.b16 %v562
    %v869 = vunpack.c.l.b16 %v563
    %v870 = vunpack.c.l.b16 %v564
    %v871 = vunpack.c.h.b16 %v564
    %v872 = vunpack.c.l.b16 %v565
    %v873 = vunpack.c.l.b16 %v566
    %v874 = vunpack.c.h.b16 %v566
    %v875 = vunpack.c.l.b16 %v567
    %v876 = vunpack.c.l.b16 %v568
    %v877 = vunpack.c.h.b16 %v568
    %v878 = vunpack.c.l.b16 %v569
    %v879 = vunpack.c.l.b16 %v570
    %v880 = vunpack.c.h.b16 %v570
    %v881 = vunpack.c.l.b16 %v571
    %v882 = vunpack.c.l.b16 %v572
    %v883 = vunpack.c.h.b16 %v572
    %v884 = vunpack.c.l.b16 %v573
    %v885 = vunpack.c.l.b16 %v574
    %v886 = vunpack.c.h.b16 %v574
    %v887 = vunpack.c.l.b16 %v575
    %v888 = vunpack.c.l.b16 %v576
    %v889 = vunpack.c.h.b16 %v576
    %v890 = vunpack.c.l.b16 %v577
    %v891 = vunpack.c.l.b16 %v578
    %v892 = vunpack.c.h.b16 %v578
    %v893 = vunpack.c.l.b16 %v579
    %v894 = vunpack.c.l.b16 %v580
    %v895 = vunpack.c.h.b16 %v580
    %v896 = vunpack.c.l.b16 %v581
    %v897 = vunpack.c.l.b16 %v582
    %v898 = vunpack.c.h.b16 %v582
    %v899 = vunpack.c.l.b16 %v583
    %v900 = vunpack.c.l.b16 %v584
    %v901 = vunpack.c.h.b16 %v584
    %v902 = vunpack.c.l.b16 %v585
    %v903 = vunpack.c.l.b16 %v586
    %v904 = vunpack.c.h.b16 %v586
    %v905 = vunpack.c.l.b16 %v587
    %v906 = vunpack.c.l.b16 %v588
    %v907 = vunpack.c.h.b16 %v588
    %v908 = vunpack.c.l.b16 %v589
    %v909 = vunpack.c.l.b16 %v590
    %v910 = vunpack.c.h.b16 %v590
    %v911 = vunpack.c.l.b16 %v591
    %v912 = vunpack.c.l.b16 %v592
    %v913 = vunpack.c.h.b16 %v592
    %v914 = vunpack.c.l.b16 %v593
    %v915 = vunpack.c.l.b16 %v594
    %v916 = vunpack.c.h.b16 %v594
    %v917 = vunpack.c.l.b16 %v595
    %v918 = vunpack.c.l.b16 %v596
    %v919 = vunpack.c.h.b16 %v596
    %v920 = vunpack.c.l.b16 %v597
    %v921 = vunpack.c.l.b16 %v598
    %v922 = vunpack.c.h.b16 %v598
    %v923 = vunpack.c.l.b16 %v599
    %v924 = vunpack.c.l.b16 %v600
    %v925 = vunpack.c.h.b16 %v600
    %v926 = vunpack.c.l.b16 %v601
    %v927 = vunpack.c.l.b16 %v602
    %v928 = vunpack.c.h.b16 %v602
    %v929 = vunpack.c.l.b16 %v603
    %v930 = vunpack.c.l.b16 %v604
    %v931 = vunpack.c.h.b16 %v604
    %v932 = vunpack.c.l.b16 %v605
    %v933 = vunpack.c.l.b16 %v606
    %v934 = vunpack.c.h.b16 %v606
    %v935 = vunpack.c.l.b16 %v607
    %v936 = vpack.c.b16 %v747, %v744
    %v937 = vpack.c.b16 %v748, %v745
    %v938 = vpack.c.b16 %v749, %v746
    %v939 = vpack.c.b16 %v753, %v750
    %v940 = vpack.c.b16 %v754, %v751
    %v941 = vpack.c.b16 %v755, %v752
    %v942 = vpack.c.b16 %v759, %v756
    %v943 = vpack.c.b16 %v760, %v757
    %v944 = vpack.c.b16 %v761, %v758
    %v945 = vpack.c.b16 %v765, %v762
    %v946 = vpack.c.b16 %v766, %v763
    %v947 = vpack.c.b16 %v767, %v764
    %v948 = vpack.c.b16 %v771, %v768
    %v949 = vpack.c.b16 %v772, %v769
    %v950 = vpack.c.b16 %v773, %v770
    %v951 = vpack.c.b16 %v777, %v774
    %v952 = vpack.c.b16 %v778, %v775
    %v953 = vpack.c.b16 %v779, %v776
    %v954 = vpack.c.b16 %v783, %v780
    %v955 = vpack.c.b16 %v784, %v781
    %v956 = vpack.c.b16 %v785, %v782
    %v957 = vpack.c.b16 %v789, %v786
    %v958 = vpack.c.b16 %v790, %v787
    %v959 = vpack.c.b16 %v791, %v788
    %v960 = vpack.c.b16 %v795, %v792
    %v961 = vpack.c.b16 %v796, %v793
    %v962 = vpack.c.b16 %v797, %v794
    %v963 = vpack.c.b16 %v801, %v798
    %v964 = vpack.c.b16 %v802, %v799
    %v965 = vpack.c.b16 %v803, %v800
    %v966 = vpack.c.b16 %v807, %v804
    %v967 = vpack.c.b16 %v808, %v805
    %v968 = vpack.c.b16 %v809, %v806
    %v969 = vpack.c.b16 %v813, %v810
    %v970 = vpack.c.b16 %v814, %v811
    %v971 = vpack.c.b16 %v815, %v812
    %v972 = vpack.c.b16 %v819, %v816
    %v973 = vpack.c.b16 %v820, %v817
    %v974 = vpack.c.b16 %v821, %v818
    %v975 = vpack.c.b16 %v825, %v822
    %v976 = vpack.c.b16 %v826, %v823
    %v977 = vpack.c.b16 %v827, %v824
    %v978 = vpack.c.b16 %v831, %v828
    %v979 = vpack.c.b16 %v832, %v829
    %v980 = vpack.c.b16 %v833, %v830
    %v981 = vpack.c.b16 %v837, %v834
    %v982 = vpack.c.b16 %v838, %v835
    %v983 = vpack.c.b16 %v839, %v836
    %v984 = vpack.c.b16 %v843, %v840
    %v985 = vpack.c.b16 %v844, %v841
    %v986 = vpack.c.b16 %v845, %v842
    %v987 = vpack.c.b16 %v849, %v846
    %v988 = vpack.c.b16 %v850, %v847
    %v989 = vpack.c.b16 %v851, %v848
    %v990 = vpack.c.b16 %v855, %v852
    %v991 = vpack.c.b16 %v856, %v853
    %v992 = vpack.c.b16 %v857, %v854
    %v993 = vpack.c.b16 %v861, %v858
    %v994 = vpack.c.b16 %v862, %v859
    %v995 = vpack.c.b16 %v863, %v860
    %v996 = vpack.c.b16 %v867, %v864
    %v997 = vpack.c.b16 %v868, %v865
    %v998 = vpack.c.b16 %v869, %v866
    %v999 = vpack.c.b16 %v873, %v870
    %v1000 = vpack.c.b16 %v874, %v871
    %v1001 = vpack.c.b16 %v875, %v872
    %v1002 = vpack.c.b16 %v879, %v876
    %v1003 = vpack.c.b16 %v880, %v877
    %v1004 = vpack.c.b16 %v881, %v878
    %v1005 = vpack.c.b16 %v885, %v882
    %v1006 = vpack.c.b16 %v886, %v883
    %v1007 = vpack.c.b16 %v887, %v884
    %v1008 = vpack.c.b16 %v891, %v888
    %v1009 = vpack.c.b16 %v892, %v889
    %v1010 = vpack.c.b16 %v893, %v890
    %v1011 = vpack.c.b16 %v897, %v894
    %v1012 = vpack.c.b16 %v898, %v895
    %v1013 = vpack.c.b16 %v899, %v896
    %v1014 = vpack.c.b16 %v903, %v900
    %v1015 = vpack.c.b16 %v904, %v901
    %v1016 = vpack.c.b16 %v905, %v902
    %v1017 = vpack.c.b16 %v909, %v906
    %v1018 = vpack.c.b16 %v910, %v907
    %v1019 = vpack.c.b16 %v911, %v908
    %v1020 = vpack.c.b16 %v915, %v912
    %v1021 = vpack.c.b16 %v916, %v913
    %v1022 = vpack.c.b16 %v917, %v914
    %v1023 = vpack.c.b16 %v921, %v918
    %v1024 = vpack.c.b16 %v922, %v919
    %v1025 = vpack.c.b16 %v923, %v920
    %v1026 = vpack.c.b16 %v927, %v924
    %v1027 = vpack.c.b16 %v928, %v925
    %v1028 = vpack.c.b16 %v929, %v926
    %v1029 = vpack.c.b16 %v933, %v930
    %v1030 = vpack.c.b16 %v934, %v931
    %v1031 = vpack.c.b16 %v935, %v932
    %1128 = vmatpush.bf16.msra.mxu0 %v957
    %1129 = vmatpush.bf16.msra.mxu0 %v954
    %1130 = vmatpush.bf16.msra.mxu0 %v951
    %1131 = vmatpush.bf16.msra.mxu0 %v948
    %1132 = vmatpush.bf16.msra.mxu0 %v945
    %1133 = vmatpush.bf16.msra.mxu0 %v942
    %1134 = vmatpush.bf16.msra.mxu0 %v939
    %1135 = vmatpush.bf16.msra.mxu0 %v936
    %1136 = vmatmul.bf16.gmra.mxu0 %v476
    %v1137 = vpop.f32.mrf.mxu0
    %v1138 = vadd.f32 %v610, %v1137
    %v1139 = vpop.f32.mrf.mxu0
    %1140 = vdwg.mxu0
    %1141 = vmatpush.bf16.msra.mxu0 %v981
    %1142 = vmatpush.bf16.msra.mxu0 %v978
    %1143 = vmatpush.bf16.msra.mxu0 %v975
    %1144 = vmatpush.bf16.msra.mxu0 %v972
    %1145 = vmatpush.bf16.msra.mxu0 %v969
    %1146 = vmatpush.bf16.msra.mxu0 %v966
    %1147 = vmatpush.bf16.msra.mxu0 %v963
    %1148 = vmatpush.bf16.msra.mxu0 %v960
    %1149 = vmatmul.bf16.gmra.mxu0 %v477
    %v1150 = vpop.f32.mrf.mxu0
    %v1151 = vadd.f32 %v1138, %v1150
    %v1152 = vpop.f32.mrf.mxu0
    %1153 = vdwg.mxu0
    %1154 = vmatpush.bf16.msra.mxu0 %v1005
    %1155 = vmatpush.bf16.msra.mxu0 %v1002
    %1156 = vmatpush.bf16.msra.mxu0 %v999
    %1157 = vmatpush.bf16.msra.mxu0 %v996
    %1158 = vmatpush.bf16.msra.mxu0 %v993
    %1159 = vmatpush.bf16.msra.mxu0 %v990
    %1160 = vmatpush.bf16.msra.mxu0 %v987
    %1161 = vmatpush.bf16.msra.mxu0 %v984
    %1162 = vmatmul.bf16.gmra.mxu0 %v478
    %v1163 = vpop.f32.mrf.mxu0
    %v1164 = vadd.f32 %v1151, %v1163
    %v1165 = vpop.f32.mrf.mxu0
    %1166 = vdwg.mxu0
    %1167 = vmatpush.bf16.msra.mxu0 %v1029
    %1168 = vmatpush.bf16.msra.mxu0 %v1026
    %1169 = vmatpush.bf16.msra.mxu0 %v1023
    %1170 = vmatpush.bf16.msra.mxu0 %v1020
    %1171 = vmatpush.bf16.msra.mxu0 %v1017
    %1172 = vmatpush.bf16.msra.mxu0 %v1014
    %1173 = vmatpush.bf16.msra.mxu0 %v1011
    %1174 = vmatpush.bf16.msra.mxu0 %v1008
    %1175 = vmatmul.bf16.gmra.mxu0 %v479
    %v1176 = vpop.f32.mrf.mxu0
    %v1177 = vadd.f32 %v1164, %v1176
    %v1178 = vpop.f32.mrf.mxu0
    %1179 = vdwg.mxu0
    %1180 = vmatpush.bf16.msra.mxu0 %v958
    %1181 = vmatpush.bf16.msra.mxu0 %v955
    %1182 = vmatpush.bf16.msra.mxu0 %v952
    %1183 = vmatpush.bf16.msra.mxu0 %v949
    %1184 = vmatpush.bf16.msra.mxu0 %v946
    %1185 = vmatpush.bf16.msra.mxu0 %v943
    %1186 = vmatpush.bf16.msra.mxu0 %v940
    %1187 = vmatpush.bf16.msra.mxu0 %v937
    %1188 = vmatmul.bf16.gmra.mxu0 %v476
    %v1189 = vpop.f32.mrf.mxu0
    %v1190 = vadd.f32 %v611, %v1189
    %v1191 = vpop.f32.mrf.mxu0
    %1192 = vdwg.mxu0
    %1193 = vmatpush.bf16.msra.mxu0 %v982
    %1194 = vmatpush.bf16.msra.mxu0 %v979
    %1195 = vmatpush.bf16.msra.mxu0 %v976
    %1196 = vmatpush.bf16.msra.mxu0 %v973
    %1197 = vmatpush.bf16.msra.mxu0 %v970
    %1198 = vmatpush.bf16.msra.mxu0 %v967
    %1199 = vmatpush.bf16.msra.mxu0 %v964
    %1200 = vmatpush.bf16.msra.mxu0 %v961
    %1201 = vmatmul.bf16.gmra.mxu0 %v477
    %v1202 = vpop.f32.mrf.mxu0
    %v1203 = vadd.f32 %v1190, %v1202
    %v1204 = vpop.f32.mrf.mxu0
    %1205 = vdwg.mxu0
    %1206 = vmatpush.bf16.msra.mxu0 %v1006
    %1207 = vmatpush.bf16.msra.mxu0 %v1003
    %1208 = vmatpush.bf16.msra.mxu0 %v1000
    %1209 = vmatpush.bf16.msra.mxu0 %v997
    %1210 = vmatpush.bf16.msra.mxu0 %v994
    %1211 = vmatpush.bf16.msra.mxu0 %v991
    %1212 = vmatpush.bf16.msra.mxu0 %v988
    %1213 = vmatpush.bf16.msra.mxu0 %v985
    %1214 = vmatmul.bf16.gmra.mxu0 %v478
    %v1215 = vpop.f32.mrf.mxu0
    %v1216 = vadd.f32 %v1203, %v1215
    %v1217 = vpop.f32.mrf.mxu0
    %1218 = vdwg.mxu0
    %1219 = vmatpush.bf16.msra.mxu0 %v1030
    %1220 = vmatpush.bf16.msra.mxu0 %v1027
    %1221 = vmatpush.bf16.msra.mxu0 %v1024
    %1222 = vmatpush.bf16.msra.mxu0 %v1021
    %1223 = vmatpush.bf16.msra.mxu0 %v1018
    %1224 = vmatpush.bf16.msra.mxu0 %v1015
    %1225 = vmatpush.bf16.msra.mxu0 %v1012
    %1226 = vmatpush.bf16.msra.mxu0 %v1009
    %1227 = vmatmul.bf16.gmra.mxu0 %v479
    %v1228 = vpop.f32.mrf.mxu0
    %v1229 = vadd.f32 %v1216, %v1228
    %v1230 = vpop.f32.mrf.mxu0
    %1231 = vdwg.mxu0
    %1232 = vmatpush.bf16.msra.mxu0 %v959
    %1233 = vmatpush.bf16.msra.mxu0 %v956
    %1234 = vmatpush.bf16.msra.mxu0 %v953
    %1235 = vmatpush.bf16.msra.mxu0 %v950
    %1236 = vmatpush.bf16.msra.mxu0 %v947
    %1237 = vmatpush.bf16.msra.mxu0 %v944
    %1238 = vmatpush.bf16.msra.mxu0 %v941
    %1239 = vmatpush.bf16.msra.mxu0 %v938
    %1240 = vmatmul.bf16.gmra.mxu0 %v476
    %v1241 = vpop.f32.mrf.mxu0
    %v1242 = vadd.f32 %v612, %v1241
    %v1243 = vpop.f32.mrf.mxu0
    %1244 = vdwg.mxu0
    %1245 = vmatpush.bf16.msra.mxu0 %v983
    %1246 = vmatpush.bf16.msra.mxu0 %v980
    %1247 = vmatpush.bf16.msra.mxu0 %v977
    %1248 = vmatpush.bf16.msra.mxu0 %v974
    %1249 = vmatpush.bf16.msra.mxu0 %v971
    %1250 = vmatpush.bf16.msra.mxu0 %v968
    %1251 = vmatpush.bf16.msra.mxu0 %v965
    %1252 = vmatpush.bf16.msra.mxu0 %v962
    %1253 = vmatmul.bf16.gmra.mxu0 %v477
    %v1254 = vpop.f32.mrf.mxu0
    %v1255 = vadd.f32 %v1242, %v1254
    %v1256 = vpop.f32.mrf.mxu0
    %1257 = vdwg.mxu0
    %1258 = vmatpush.bf16.msra.mxu0 %v1007
    %1259 = vmatpush.bf16.msra.mxu0 %v1004
    %1260 = vmatpush.bf16.msra.mxu0 %v1001
    %1261 = vmatpush.bf16.msra.mxu0 %v998
    %1262 = vmatpush.bf16.msra.mxu0 %v995
    %1263 = vmatpush.bf16.msra.mxu0 %v992
    %1264 = vmatpush.bf16.msra.mxu0 %v989
    %1265 = vmatpush.bf16.msra.mxu0 %v986
    %1266 = vmatmul.bf16.gmra.mxu0 %v478
    %v1267 = vpop.f32.mrf.mxu0
    %v1268 = vadd.f32 %v1255, %v1267
    %v1269 = vpop.f32.mrf.mxu0
    %1270 = vdwg.mxu0
    %1271 = vmatpush.bf16.msra.mxu0 %v1031
    %1272 = vmatpush.bf16.msra.mxu0 %v1028
    %1273 = vmatpush.bf16.msra.mxu0 %v1025
    %1274 = vmatpush.bf16.msra.mxu0 %v1022
    %1275 = vmatpush.bf16.msra.mxu0 %v1019
    %1276 = vmatpush.bf16.msra.mxu0 %v1016
    %1277 = vmatpush.bf16.msra.mxu0 %v1013
    %1278 = vmatpush.bf16.msra.mxu0 %v1010
    %1279 = vmatmul.bf16.gmra.mxu0 %v479
    %v1280 = vpop.f32.mrf.mxu0
    %v1281 = vadd.f32 %v1268, %v1280
    %v1282 = vpop.f32.mrf.mxu0
    %1283 = vdwg.mxu0
    %v1284 = vmax.f32 %v1177, 0.0
    %v1285 = vmax.f32 %v1229, 0.0
    %v1286 = vmax.f32 %v1281, 0.0
    %v1287 = vpack.c.bf16 %v1284, %v1284
    %v1288 = vpack.c.bf16 %v1285, %v1285
    %v1289 = vpack.c.bf16 %v1286, %v1286
    %v1290 = vld [vmem:[#allocation11] sm:$0xf]
    %v1291 = vld [vmem:[#allocation11 + $0x4] sm:$0xf]
    %v1292 = vld [vmem:[#allocation11 + $0x8] sm:$0xf]
    %v1293 = vld [vmem:[#allocation11 + $0xc] sm:$0xf]
    %v1294 = vld [vmem:[#allocation11 + $0x10] sm:$0xf]
    %v1295 = vld [vmem:[#allocation11 + $0x14] sm:$0xf]
    %v1296 = vld [vmem:[#allocation11 + $0x18] sm:$0xf]
    %v1297 = vld [vmem:[#allocation11 + $0x1c] sm:$0xf]
    %v1298 = vld [vmem:[#allocation11 + $0x20] sm:$0xf]
    %v1299 = vld [vmem:[#allocation11 + $0x24] sm:$0xf]
    %v1300 = vld [vmem:[#allocation11 + $0x28] sm:$0xf]
    %v1301 = vld [vmem:[#allocation11 + $0x2c] sm:$0xf]
    %v1302 = vld [vmem:[#allocation11 + $0x30] sm:$0xf]
    %v1303 = vld [vmem:[#allocation11 + $0x34] sm:$0xf]
    %v1304 = vld [vmem:[#allocation11 + $0x38] sm:$0xf]
    %v1305 = vld [vmem:[#allocation11 + $0x3c] sm:$0xf]
    %v1306 = vld [vmem:[#allocation11 + $0x40] sm:$0xf]
    %v1307 = vld [vmem:[#allocation11 + $0x44] sm:$0xf]
    %v1308 = vld [vmem:[#allocation11 + $0x48] sm:$0xf]
    %v1309 = vld [vmem:[#allocation11 + $0x4c] sm:$0xf]
    %v1310 = vld [vmem:[#allocation11 + $0x50] sm:$0xf]
    %v1311 = vld [vmem:[#allocation11 + $0x54] sm:$0xf]
    %v1312 = vld [vmem:[#allocation11 + $0x58] sm:$0xf]
    %v1313 = vld [vmem:[#allocation11 + $0x5c] sm:$0xf]
    %v1314 = vld [vmem:[#allocation11 + $0x60] sm:$0xf]
    %v1315 = vld [vmem:[#allocation11 + $0x64] sm:$0xf]
    %v1316 = vld [vmem:[#allocation11 + $0x68] sm:$0xf]
    %v1317 = vld [vmem:[#allocation11 + $0x6c] sm:$0xf]
    %v1318 = vld [vmem:[#allocation11 + $0x70] sm:$0xf]
    %v1319 = vld [vmem:[#allocation11 + $0x74] sm:$0xf]
    %v1320 = vld [vmem:[#allocation11 + $0x78] sm:$0xf]
    %v1321 = vld [vmem:[#allocation11 + $0x7c] sm:$0xf]
    %v1322 = vld [vmem:[#allocation11 + $0x80] sm:$0xf]
    %v1323 = vld [vmem:[#allocation11 + $0x84] sm:$0xf]
    %v1324 = vld [vmem:[#allocation11 + $0x88] sm:$0xf]
    %v1325 = vld [vmem:[#allocation11 + $0x8c] sm:$0xf]
    %v1326 = vld [vmem:[#allocation11 + $0x90] sm:$0xf]
    %v1327 = vld [vmem:[#allocation11 + $0x94] sm:$0xf]
    %v1328 = vld [vmem:[#allocation11 + $0x98] sm:$0xf]
    %v1329 = vld [vmem:[#allocation11 + $0x9c] sm:$0xf]
    %v1330 = vld [vmem:[#allocation11 + $0xa0] sm:$0xf]
    %v1331 = vld [vmem:[#allocation11 + $0xa4] sm:$0xf]
    %v1332 = vld [vmem:[#allocation11 + $0xa8] sm:$0xf]
    %v1333 = vld [vmem:[#allocation11 + $0xac] sm:$0xf]
    %v1334 = vld [vmem:[#allocation11 + $0xb0] sm:$0xf]
    %v1335 = vld [vmem:[#allocation11 + $0xb4] sm:$0xf]
    %v1336 = vld [vmem:[#allocation11 + $0xb8] sm:$0xf]
    %v1337 = vld [vmem:[#allocation11 + $0xbc] sm:$0xf]
    %v1338 = vld [vmem:[%s7] sm:$0x1]
    %v1340 = vperm.slane %v1338, 0
    %v1390 = vunpack.c.l.b16 %v1290
    %v1391 = vunpack.c.l.b16 %v1291
    %v1392 = vunpack.c.l.b16 %v1292
    %v1393 = vunpack.c.l.b16 %v1293
    %v1394 = vunpack.c.l.b16 %v1294
    %v1395 = vunpack.c.l.b16 %v1295
    %v1396 = vunpack.c.l.b16 %v1296
    %v1397 = vunpack.c.l.b16 %v1297
    %v1398 = vunpack.c.l.b16 %v1298
    %v1399 = vunpack.c.l.b16 %v1299
    %v1400 = vunpack.c.l.b16 %v1300
    %v1401 = vunpack.c.l.b16 %v1301
    %v1402 = vunpack.c.l.b16 %v1302
    %v1403 = vunpack.c.l.b16 %v1303
    %v1404 = vunpack.c.l.b16 %v1304
    %v1405 = vunpack.c.l.b16 %v1305
    %v1406 = vunpack.c.l.b16 %v1306
    %v1407 = vunpack.c.l.b16 %v1307
    %v1408 = vunpack.c.l.b16 %v1308
    %v1409 = vunpack.c.l.b16 %v1309
    %v1410 = vunpack.c.l.b16 %v1310
    %v1411 = vunpack.c.l.b16 %v1311
    %v1412 = vunpack.c.l.b16 %v1312
    %v1413 = vunpack.c.l.b16 %v1313
    %v1414 = vunpack.c.l.b16 %v1314
    %v1415 = vunpack.c.l.b16 %v1315
    %v1416 = vunpack.c.l.b16 %v1316
    %v1417 = vunpack.c.l.b16 %v1317
    %v1418 = vunpack.c.l.b16 %v1318
    %v1419 = vunpack.c.l.b16 %v1319
    %v1420 = vunpack.c.l.b16 %v1320
    %v1421 = vunpack.c.l.b16 %v1321
    %v1422 = vunpack.c.l.b16 %v1322
    %v1423 = vunpack.c.l.b16 %v1323
    %v1424 = vunpack.c.l.b16 %v1324
    %v1425 = vunpack.c.l.b16 %v1325
    %v1426 = vunpack.c.l.b16 %v1326
    %v1427 = vunpack.c.l.b16 %v1327
    %v1428 = vunpack.c.l.b16 %v1328
    %v1429 = vunpack.c.l.b16 %v1329
    %v1430 = vunpack.c.l.b16 %v1330
    %v1431 = vunpack.c.l.b16 %v1331
    %v1432 = vunpack.c.l.b16 %v1332
    %v1433 = vunpack.c.l.b16 %v1333
    %v1434 = vunpack.c.l.b16 %v1334
    %v1435 = vunpack.c.l.b16 %v1335
    %v1436 = vunpack.c.l.b16 %v1336
    %v1437 = vunpack.c.l.b16 %v1337
    %v1438 = vpack.c.b16 %v1391, %v1390
    %v1439 = vpack.c.b16 %v1393, %v1392
    %v1440 = vpack.c.b16 %v1395, %v1394
    %v1441 = vpack.c.b16 %v1397, %v1396
    %v1442 = vpack.c.b16 %v1399, %v1398
    %v1443 = vpack.c.b16 %v1401, %v1400
    %v1444 = vpack.c.b16 %v1403, %v1402
    %v1445 = vpack.c.b16 %v1405, %v1404
    %v1446 = vpack.c.b16 %v1407, %v1406
    %v1447 = vpack.c.b16 %v1409, %v1408
    %v1448 = vpack.c.b16 %v1411, %v1410
    %v1449 = vpack.c.b16 %v1413, %v1412
    %v1450 = vpack.c.b16 %v1415, %v1414
    %v1451 = vpack.c.b16 %v1417, %v1416
    %v1452 = vpack.c.b16 %v1419, %v1418
    %v1453 = vpack.c.b16 %v1421, %v1420
    %v1454 = vpack.c.b16 %v1423, %v1422
    %v1455 = vpack.c.b16 %v1425, %v1424
    %v1456 = vpack.c.b16 %v1427, %v1426
    %v1457 = vpack.c.b16 %v1429, %v1428
    %v1458 = vpack.c.b16 %v1431, %v1430
    %v1459 = vpack.c.b16 %v1433, %v1432
    %v1460 = vpack.c.b16 %v1435, %v1434
    %v1461 = vpack.c.b16 %v1437, %v1436
    %1486 = vmatpush.bf16.msra.mxu0 %v1445
    %1487 = vmatpush.bf16.msra.mxu0 %v1444
    %1488 = vmatpush.bf16.msra.mxu0 %v1443
    %1489 = vmatpush.bf16.msra.mxu0 %v1442
    %1490 = vmatpush.bf16.msra.mxu0 %v1441
    %1491 = vmatpush.bf16.msra.mxu0 %v1440
    %1492 = vmatpush.bf16.msra.mxu0 %v1439
    %1493 = vmatpush.bf16.msra.mxu0 %v1438
    %1494 = vmatmul.bf16.gmra.mxu0 %v1287
    %v1495 = vpop.f32.mrf.mxu0
    %v1496 = vadd.f32 %v1340, %v1495
    %v1497 = vpop.f32.mrf.mxu0
    %1498 = vdwg.mxu0
    %1499 = vmatpush.bf16.msra.mxu0 %v1453
    %1500 = vmatpush.bf16.msra.mxu0 %v1452
    %1501 = vmatpush.bf16.msra.mxu0 %v1451
    %1502 = vmatpush.bf16.msra.mxu0 %v1450
    %1503 = vmatpush.bf16.msra.mxu0 %v1449
    %1504 = vmatpush.bf16.msra.mxu0 %v1448
    %1505 = vmatpush.bf16.msra.mxu0 %v1447
    %1506 = vmatpush.bf16.msra.mxu0 %v1446
    %1507 = vmatmul.bf16.gmra.mxu0 %v1288
    %v1508 = vpop.f32.mrf.mxu0
    %v1509 = vadd.f32 %v1496, %v1508
    %v1510 = vpop.f32.mrf.mxu0
    %1511 = vdwg.mxu0
    %1512 = vmatpush.bf16.msra.mxu0 %v1461
    %1513 = vmatpush.bf16.msra.mxu0 %v1460
    %1514 = vmatpush.bf16.msra.mxu0 %v1459
    %1515 = vmatpush.bf16.msra.mxu0 %v1458
    %1516 = vmatpush.bf16.msra.mxu0 %v1457
    %1517 = vmatpush.bf16.msra.mxu0 %v1456
    %1518 = vmatpush.bf16.msra.mxu0 %v1455
    %1519 = vmatpush.bf16.msra.mxu0 %v1454
    %1520 = vmatmul.bf16.gmra.mxu0 %v1289
    %v1521 = vpop.f32.mrf.mxu0
    %v1522 = vadd.f32 %v1509, %v1521
    %v1523 = vpop.f32.mrf.mxu0
    %1524 = vdwg.mxu0
    %v1525 = vtanh.pop %v1522
    %v1526 = vstv %s152
    %v1527 = vmul.f32 %v1526, %v1525
    %v1528 = vld [vmem:[%s8] sm:$0x1]
    %v1530 = vperm.slane %v1528, 0
    %v1532 = vadd.f32 %v455, %v1530
    %v1533 = vmul.f32 %v1532, %v1532
    %1534 = vadd.xlane.f32.xlu0 %v1533
    %v1535 = vpop.xlane.xlu0 %1534
    %v1536 = vmax.f32 %v1535, 1e-24
    %v1537 = vrsqrt.pop %v1536
    %v1538 = vmul.f32 %v1537, %v1536
    %v1539 = vmul.f32 %v1538, %v1537
    %v1540 = vmul.f32 0.5, %v1539
    %v1541 = vsub.f32 1.5, %v1540
    %v1542 = vmul.f32 %v1537, %v1541
    %vm1543 = vweird.f32 %v1536
    %vm1544 = vweird.f32 %v1537
    %vm1545 = vmor %vm1543, %vm1544
    %v1546 = vsel %vm1545, %v1537, %v1542
    %v1547 = vmul.f32 %v1532, %v1546
    %v1548 = vtanh.pop %v1547
    %v1549 = vpack.c.bf16 %v1548, %v1548
    %v1550 = vld [vmem:[#allocation12] sm:$0xf]
    %v1551 = vld [vmem:[#allocation12 + $0x4] sm:$0xf]
    %v1552 = vld [vmem:[#allocation12 + $0x8] sm:$0xf]
    %v1553 = vld [vmem:[#allocation12 + $0xc] sm:$0xf]
    %v1554 = vld [vmem:[#allocation12 + $0x10] sm:$0xf]
    %v1555 = vld [vmem:[#allocation12 + $0x14] sm:$0xf]
    %v1556 = vld [vmem:[#allocation12 + $0x18] sm:$0xf]
    %v1557 = vld [vmem:[#allocation12 + $0x1c] sm:$0xf]
    %v1558 = vld [vmem:[#allocation12 + $0x20] sm:$0xf]
    %v1559 = vld [vmem:[#allocation12 + $0x24] sm:$0xf]
    %v1560 = vld [vmem:[#allocation12 + $0x28] sm:$0xf]
    %v1561 = vld [vmem:[#allocation12 + $0x2c] sm:$0xf]
    %v1562 = vld [vmem:[#allocation12 + $0x30] sm:$0xf]
    %v1563 = vld [vmem:[#allocation12 + $0x34] sm:$0xf]
    %v1564 = vld [vmem:[#allocation12 + $0x38] sm:$0xf]
    %v1565 = vld [vmem:[#allocation12 + $0x3c] sm:$0xf]
    %v1582 = vunpack.c.l.b16 %v1550
    %v1583 = vunpack.c.l.b16 %v1551
    %v1584 = vunpack.c.l.b16 %v1552
    %v1585 = vunpack.c.l.b16 %v1553
    %v1586 = vunpack.c.l.b16 %v1554
    %v1587 = vunpack.c.l.b16 %v1555
    %v1588 = vunpack.c.l.b16 %v1556
    %v1589 = vunpack.c.l.b16 %v1557
    %v1590 = vunpack.c.l.b16 %v1558
    %v1591 = vunpack.c.l.b16 %v1559
    %v1592 = vunpack.c.l.b16 %v1560
    %v1593 = vunpack.c.l.b16 %v1561
    %v1594 = vunpack.c.l.b16 %v1562
    %v1595 = vunpack.c.l.b16 %v1563
    %v1596 = vunpack.c.l.b16 %v1564
    %v1597 = vunpack.c.l.b16 %v1565
    %v1598 = vpack.c.b16 %v1583, %v1582
    %v1599 = vpack.c.b16 %v1585, %v1584
    %v1600 = vpack.c.b16 %v1587, %v1586
    %v1601 = vpack.c.b16 %v1589, %v1588
    %v1602 = vpack.c.b16 %v1591, %v1590
    %v1603 = vpack.c.b16 %v1593, %v1592
    %v1604 = vpack.c.b16 %v1595, %v1594
    %v1605 = vpack.c.b16 %v1597, %v1596
    %1614 = vmatpush.bf16.msra.mxu0 %v1605
    %1615 = vmatpush.bf16.msra.mxu0 %v1604
    %1616 = vmatpush.bf16.msra.mxu0 %v1603
    %1617 = vmatpush.bf16.msra.mxu0 %v1602
    %1618 = vmatpush.bf16.msra.mxu0 %v1601
    %1619 = vmatpush.bf16.msra.mxu0 %v1600
    %1620 = vmatpush.bf16.msra.mxu0 %v1599
    %1621 = vmatpush.bf16.msra.mxu0 %v1598
    %1622 = vmatmul.bf16.gmra.mxu0 %v1549
    %v1623 = vpop.f32.mrf.mxu0
    %v1624 = vadd.f32 %v442, %v1623
    %v1625 = vpop.f32.mrf.mxu0
    %1626 = vdwg.mxu0
    %v1627 = vld [vmem:[%s10] sm:$0x1]
    %v1629 = vperm.slane %v1627, 0
    %v1631 = vadd.f32 %v1624, %v1629
    %v1632 = vtanh.pop %v1631
    %v1633 = vpack.c.bf16 %v1632, %v1632
    %v1634 = vld [vmem:[#allocation14] sm:$0xf]
    %v1635 = vld [vmem:[#allocation14 + $0x4] sm:$0xf]
    %v1636 = vld [vmem:[#allocation14 + $0x8] sm:$0xf]
    %v1637 = vld [vmem:[#allocation14 + $0xc] sm:$0xf]
    %v1638 = vld [vmem:[#allocation14 + $0x10] sm:$0xf]
    %v1639 = vld [vmem:[#allocation14 + $0x14] sm:$0xf]
    %v1640 = vld [vmem:[#allocation14 + $0x18] sm:$0xf]
    %v1641 = vld [vmem:[#allocation14 + $0x1c] sm:$0xf]
    %v1642 = vld [vmem:[#allocation14 + $0x20] sm:$0xf]
    %v1643 = vld [vmem:[#allocation14 + $0x24] sm:$0xf]
    %v1644 = vld [vmem:[#allocation14 + $0x28] sm:$0xf]
    %v1645 = vld [vmem:[#allocation14 + $0x2c] sm:$0xf]
    %v1646 = vld [vmem:[#allocation14 + $0x30] sm:$0xf]
    %v1647 = vld [vmem:[#allocation14 + $0x34] sm:$0xf]
    %v1648 = vld [vmem:[#allocation14 + $0x38] sm:$0xf]
    %v1649 = vld [vmem:[#allocation14 + $0x3c] sm:$0xf]
    %v1650 = vld [vmem:[%s12] sm:$0x1]
    %v1652 = vperm.slane %v1650, 0
    %v1670 = vunpack.c.l.b16 %v1634
    %v1671 = vunpack.c.l.b16 %v1635
    %v1672 = vunpack.c.l.b16 %v1636
    %v1673 = vunpack.c.l.b16 %v1637
    %v1674 = vunpack.c.l.b16 %v1638
    %v1675 = vunpack.c.l.b16 %v1639
    %v1676 = vunpack.c.l.b16 %v1640
    %v1677 = vunpack.c.l.b16 %v1641
    %v1678 = vunpack.c.l.b16 %v1642
    %v1679 = vunpack.c.l.b16 %v1643
    %v1680 = vunpack.c.l.b16 %v1644
    %v1681 = vunpack.c.l.b16 %v1645
    %v1682 = vunpack.c.l.b16 %v1646
    %v1683 = vunpack.c.l.b16 %v1647
    %v1684 = vunpack.c.l.b16 %v1648
    %v1685 = vunpack.c.l.b16 %v1649
    %v1686 = vpack.c.b16 %v1671, %v1670
    %v1687 = vpack.c.b16 %v1673, %v1672
    %v1688 = vpack.c.b16 %v1675, %v1674
    %v1689 = vpack.c.b16 %v1677, %v1676
    %v1690 = vpack.c.b16 %v1679, %v1678
    %v1691 = vpack.c.b16 %v1681, %v1680
    %v1692 = vpack.c.b16 %v1683, %v1682
    %v1693 = vpack.c.b16 %v1685, %v1684
    %1702 = vmatpush.bf16.msra.mxu0 %v1693
    %1703 = vmatpush.bf16.msra.mxu0 %v1692
    %1704 = vmatpush.bf16.msra.mxu0 %v1691
    %1705 = vmatpush.bf16.msra.mxu0 %v1690
    %1706 = vmatpush.bf16.msra.mxu0 %v1689
    %1707 = vmatpush.bf16.msra.mxu0 %v1688
    %1708 = vmatpush.bf16.msra.mxu0 %v1687
    %1709 = vmatpush.bf16.msra.mxu0 %v1686
    %1710 = vmatmul.bf16.gmra.mxu0 %v1633
    %v1711 = vpop.f32.mrf.mxu0
    %v1712 = vadd.f32 %v1652, %v1711
    %v1713 = vpop.f32.mrf.mxu0
    %1714 = vdwg.mxu0
    %v1715 = vmul.f32 %v1712, %v1712
    %1716 = vadd.xlane.f32.xlu0 %v1715
    %v1717 = vpop.xlane.xlu0 %1716
    %v1718 = vmax.f32 %v1717, 1e-24
    %v1719 = vrsqrt.pop %v1718
    %v1720 = vmul.f32 %v1719, %v1718
    %v1721 = vmul.f32 %v1720, %v1719
    %v1722 = vmul.f32 0.5, %v1721
    %v1723 = vsub.f32 1.5, %v1722
    %v1724 = vmul.f32 %v1719, %v1723
    %vm1725 = vweird.f32 %v1718
    %vm1726 = vweird.f32 %v1719
    %vm1727 = vmor %vm1725, %vm1726
    %v1728 = vsel %vm1727, %v1719, %v1724
    %v1729 = vmul.f32 %v1712, %v1728
    %v1730 = vadd.f32 %v1729, %v1527
    %1731 = vst [vmem:[#allocation15] sm:$0xff] %v1730
    // Predicated region
    $region82: #{tpu_custom_call.1} parent=1 // pred_check
      _
    $region83: #{tpu_custom_call.1} parent=1 // pred_check_branch
      %1733 = sbr.rel (0) target = $region85
    $region84: #{tpu_custom_call.1} parent=1 // pred_region
      %1735 = vsyncadd [#allocation5], 0
      %s1737 = sshll.u32 [#allocation15], 4
      %s1738 = int_to_ptr.vmem [resolvable:$true] %s1737
      %s1739 = sshll.u32 %s13, 4
      %s1740 = int_to_ptr.hbm [resolvable:$true] %s1739
      %1742 = dma.vmem_to_hbm [thread:$0]  %s1738, 128, %s1740, [#allocation5]
    $region85: #{tpu_custom_call.1} parent=1 // pred_fallthru
      _
    // Predicated region
    $region86: #{tpu_custom_call.1} parent=1 // pred_check
      _
    $region87: #{tpu_custom_call.1} parent=1 // pred_check_branch
      %1744 = sbr.rel (0) target = $region89
    $region88: #{tpu_custom_call.1} parent=1 // pred_region
      %1746 = dma.done [#allocation5], 128
    $region89: #{tpu_custom_call.1} parent=1 // pred_fallthru
      _
    %1747 = vsyncpa [#allocation4], 1
    %1748 = vsyncpa [#allocation7], 1
    %1749 = vsyncpa [#allocation10], 1
    %1750 = vsyncpa [#allocation13], 1
    %1751 = vsyncpa [#allocation5], 1

</llo_original>
